<compile_context>
chip_gen: v7x
topology: tpu7x:2x2x1
jax: 0.10.0
libtpu: 0.0.40
codegen_flags: <defaults>
</compile_context>

<pallas_src>
import jax
import jax.numpy as jnp
from jax.experimental import pallas as pl
from jax.experimental.pallas import tpu as pltpu


def make_acmodel_kernel(tb, Bp, H, L):
    """Build the fused rollout kernel for a time block of `tb` steps."""

    def kernel(
        xs_ref,       # (tb*Bp, IN)  inputs for this time block, t-major flattened
        states0_ref,  # (L, Bp, 2H)  initial h||c
        w_in_ref,     # (IN, H)
        b_in_ref,     # (1, H)
        w_ih_ref,     # (L, H, 4H)   gate order (i, f, o, g)
        w_hh_ref,     # (L, H, 4H)
        b_g_ref,      # (L, 1, 4H)   b_ih + b_hh, same gate order
        w_h1_ref,     # (H, 128)     [w_a1 | w_c1]
        b_h1_ref,     # (1, 128)     [b_a1 | b_c1]
        w_h2_ref,     # (128, NP)    block-diag {w_a2, w_c2}, lane padded
        b_h2_ref,     # (1, NP)
        out_ref,      # (tb*Bp, NP)  [actor | value | 0-pad] per step
        hc_ref,       # (L, Bp, 2H)  running h||c (resident across time blocks)
        h_scratch,    # (tb*Bp, H)   VMEM stash of per-step final-layer h
    ):
        blk = pl.program_id(0)

        @pl.when(blk == 0)
        def _():
            hc_ref[...] = states0_ref[...]

        # ---- prologue: hoisted non-recurrent matmuls over the whole block ----
        xs = xs_ref[...]                                                 # (tb*Bp, IN)
        hx0 = jnp.dot(xs, w_in_ref[...],
                      preferred_element_type=jnp.float32) + b_in_ref[...]
        # layer-0 input contribution to the gates (independent of the recurrence)
        gx0 = jnp.dot(hx0, w_ih_ref[0],
                      preferred_element_type=jnp.float32) + b_g_ref[0]   # (tb*Bp, 4H)

        hs = [hc_ref[i, :, :H] for i in range(L)]
        cs = [hc_ref[i, :, H:] for i in range(L)]

        # ---- recurrence: fully unrolled time loop (== lax.fori_loop(unroll=True)
        # with static trip count); only h_prev @ W_hh per layer on the serial path ----
        for t in range(tb):
            r0 = t * Bp
            hx = None
            for i in range(L):
                if i == 0:
                    gates = gx0[r0:r0 + Bp, :] + jnp.dot(
                        hs[0], w_hh_ref[0], preferred_element_type=jnp.float32)
                else:
                    gates = (jnp.dot(hx, w_ih_ref[i],
                                     preferred_element_type=jnp.float32)
                             + jnp.dot(hs[i], w_hh_ref[i],
                                       preferred_element_type=jnp.float32)
                             + b_g_ref[i])
                # gate order (i, f, o, g): one sigmoid over 3H lanes, one tanh over H
                sig = jax.nn.sigmoid(gates[:, :3 * H])
                i_g = sig[:, 0 * H:1 * H]
                f_g = sig[:, 1 * H:2 * H]
                o_g = sig[:, 2 * H:3 * H]
                g_g = jnp.tanh(gates[:, 3 * H:])
                cx = f_g * cs[i] + i_g * g_g
                hx = o_g * jnp.tanh(cx)
                hs[i] = hx
                cs[i] = cx
            h_scratch[r0:r0 + Bp, :] = hx       # stash final-layer h for the epilogue

        # write the running state back with slice stores (no concatenate)
        for i in range(L):
            hc_ref[i, :, :H] = hs[i]
            hc_ref[i, :, H:] = cs[i]

        # ---- epilogue: fused actor/critic heads over all tb steps at once ----
        # NOTE: in the reference module `res = x + logTemperature` is immediately
        # overwritten by `res = x`, so logTemperature does not affect the output.
        h_all = h_scratch[...]                                           # (tb*Bp, H)
        h1 = jnp.maximum(
            jnp.dot(h_all, w_h1_ref[...],
                    preferred_element_type=jnp.float32) + b_h1_ref[...], 0.0)
        out_ref[...] = (jnp.dot(h1, w_h2_ref[...],
                                preferred_element_type=jnp.float32) + b_h2_ref[...])

    return kernel


def init_params(key, input_size, hidden_size, output_size, n_layers):
    """Deterministic synthetic parameter initialization (shapes match ACModel)."""
    ks = jax.random.split(key, 16)
    s = 0.1
    return {
        "w_in": s * jax.random.normal(ks[0], (input_size, hidden_size), jnp.float32),
        "b_in": s * jax.random.normal(ks[1], (1, hidden_size), jnp.float32),
        "w_ih": s * jax.random.normal(ks[2], (n_layers, hidden_size, 4 * hidden_size), jnp.float32),
        "w_hh": s * jax.random.normal(ks[3], (n_layers, hidden_size, 4 * hidden_size), jnp.float32),
        "b_ih": s * jax.random.normal(ks[4], (n_layers, 1, 4 * hidden_size), jnp.float32),
        "b_hh": s * jax.random.normal(ks[5], (n_layers, 1, 4 * hidden_size), jnp.float32),
        "w_a1": s * jax.random.normal(ks[6], (hidden_size, 64), jnp.float32),
        "b_a1": s * jax.random.normal(ks[7], (1, 64), jnp.float32),
        "w_a2": s * jax.random.normal(ks[8], (64, output_size), jnp.float32),
        "b_a2": s * jax.random.normal(ks[9], (1, output_size), jnp.float32),
        "w_c1": s * jax.random.normal(ks[10], (hidden_size, 64), jnp.float32),
        "b_c1": s * jax.random.normal(ks[11], (1, 64), jnp.float32),
        "w_c2": s * jax.random.normal(ks[12], (64, 1), jnp.float32),
        "b_c2": s * jax.random.normal(ks[13], (1, 1), jnp.float32),
        # logTemperature exists in the module but does not affect the forward output.
        "log_temperature": 1.54 * jnp.ones((1,), jnp.float32),
    }


def fuse_params(p):
    """One-time wrapper-side weight fusion / gate reordering (exact up to f32 assoc.)."""
    OUT = p["w_a2"].shape[1]
    A1 = p["w_a1"].shape[1]                 # 64
    C1 = p["w_c1"].shape[1]                 # 64
    NP = max(128, ((OUT + 1 + 127) // 128) * 128)   # lane-dense output slab width

    def to_ifog(w):
        # PyTorch gate order (i, f, g, o) -> (i, f, o, g) along the last axis so the
        # kernel applies sigmoid to one contiguous 3H slice and tanh to one H slice.
        H = w.shape[-1] // 4
        return jnp.concatenate([w[..., :2 * H], w[..., 3 * H:], w[..., 2 * H:3 * H]],
                               axis=-1)

    # block-diagonal second head: cols [0:OUT] = actor, col OUT = critic, rest 0
    w_h2 = jnp.zeros((A1 + C1, NP), jnp.float32)
    w_h2 = w_h2.at[:A1, :OUT].set(p["w_a2"])
    w_h2 = w_h2.at[A1:, OUT].set(p["w_c2"][:, 0])
    b_h2 = jnp.zeros((1, NP), jnp.float32)
    b_h2 = b_h2.at[:, :OUT].set(p["b_a2"])
    b_h2 = b_h2.at[:, OUT].set(p["b_c2"][0, 0])

    return dict(
        w_in=p["w_in"], b_in=p["b_in"],
        w_ih=to_ifog(p["w_ih"]),                                # (L, H, 4H)
        w_hh=to_ifog(p["w_hh"]),                                # (L, H, 4H)
        b_g=to_ifog(p["b_ih"] + p["b_hh"]),                     # (L, 1, 4H)
        w_h1=jnp.concatenate([p["w_a1"], p["w_c1"]], axis=1),   # (H, 128)
        b_h1=jnp.concatenate([p["b_a1"], p["b_c1"]], axis=1),   # (1, 128)
        w_h2=w_h2, b_h2=b_h2,
        out_dim=OUT,
    )


def acmodel_rollout(xs, states, fused, time_block=None):
    """Fused T-step rollout.  xs: (T, B, IN); states: (L, 2, B, H).
    Returns (res (T,B,OUT), value (T,B), out_states (L,2,B,H)) equivalent to
    calling ACModel.forward T times, feeding states forward."""
    T, B, IN = xs.shape
    L, _, _, H = states.shape
    OUT = fused["out_dim"]
    HW = fused["w_h1"].shape[1]      # fused head-1 width (128)
    NP = fused["w_h2"].shape[1]      # lane-dense output slab width (128)

    Bp = ((B + 7) // 8) * 8          # pad batch to full sublanes
    xs_p = xs if Bp == B else jnp.pad(xs, ((0, 0), (0, Bp - B), (0, 0)))
    states_p = (states if Bp == B
                else jnp.pad(states, ((0, 0), (0, 0), (0, Bp - B), (0, 0))))
    states_hc = jnp.concatenate([states_p[:, 0], states_p[:, 1]], axis=-1)  # (L, Bp, 2H)

    # Whole rollout in one grid step for small T (amortizes grid overhead and gives
    # the hoisted matmuls M = TB*Bp rows); larger T falls back to time blocking.
    if time_block is None:
        time_block = T if T <= 32 else 16
    while T % time_block:            # simple divisor fallback
        time_block -= 1
    ntb = T // time_block

    xs2d = xs_p.reshape(T * Bp, IN)  # t-major rows: step t occupies rows [t*Bp, (t+1)*Bp)

    kernel = make_acmodel_kernel(time_block, Bp, H, L)

    grid_spec = pltpu.PrefetchScalarGridSpec(
        num_scalar_prefetch=0,
        grid=(ntb,),
        in_specs=[
            pl.BlockSpec((time_block * Bp, IN), lambda b: (b, 0)),   # streamed inputs
            pl.BlockSpec((L, Bp, 2 * H), lambda b: (0, 0, 0)),       # initial states (resident)
            pl.BlockSpec((IN, H), lambda b: (0, 0)),                 # weights: resident
            pl.BlockSpec((1, H), lambda b: (0, 0)),
            pl.BlockSpec((L, H, 4 * H), lambda b: (0, 0, 0)),
            pl.BlockSpec((L, H, 4 * H), lambda b: (0, 0, 0)),
            pl.BlockSpec((L, 1, 4 * H), lambda b: (0, 0, 0)),
            pl.BlockSpec((H, HW), lambda b: (0, 0)),
            pl.BlockSpec((1, HW), lambda b: (0, 0)),
            pl.BlockSpec((HW, NP), lambda b: (0, 0)),
            pl.BlockSpec((1, NP), lambda b: (0, 0)),
        ],
        out_specs=(
            pl.BlockSpec((time_block * Bp, NP), lambda b: (b, 0)),   # per-block output slab
            pl.BlockSpec((L, Bp, 2 * H), lambda b: (0, 0, 0)),       # final states (resident)
        ),
        scratch_shapes=[pltpu.VMEM((time_block * Bp, H), jnp.float32)],
    )

    out2d, out_hc = pl.pallas_call(
        kernel,
        out_shape=(
            jax.ShapeDtypeStruct((T * Bp, NP), jnp.float32),
            jax.ShapeDtypeStruct((L, Bp, 2 * H), jnp.float32),
        ),
        grid_spec=grid_spec,
        # initial-state input aliases the final-state output (same shape/dtype)
        input_output_aliases={1: 1},
        compiler_params=pltpu.CompilerParams(
            dimension_semantics=("arbitrary",)),   # recurrence: time axis is sequential
    )(xs2d, states_hc,
      fused["w_in"], fused["b_in"],
      fused["w_ih"], fused["w_hh"], fused["b_g"],
      fused["w_h1"], fused["b_h1"], fused["w_h2"], fused["b_h2"])

    out_slab = out2d.reshape(T, Bp, NP)
    res = out_slab[:, :B, :OUT]                                   # (T, B, OUT)
    value = out_slab[:, :B, OUT]                                  # (T, B) == squeeze(1)
    out_states = jnp.stack([out_hc[:, :B, :H], out_hc[:, :B, H:]], axis=1)  # (L,2,B,H)
    return res, value, out_states


def acmodel_forward(x, states, fused):
    """Single-step API matching ACModel.forward: returns (res, value, out_states)."""
    # TODO(synk): is_lobotomized branch (res = log(rand)) not implemented; default path only.
    res, value, out_states = acmodel_rollout(x[None], states, fused)
    return res[0], value[0], out_states


def acmodel_reference(xs, states, p):
    """Pure-JAX step-by-step reference mirroring the PyTorch module (unfused math)."""
    H = p["w_in"].shape[1]
    L = states.shape[0]

    def step(carry, x):
        hx = x @ p["w_in"] + p["b_in"]
        new_states = []
        for i in range(L):
            h_prev, c_prev = carry[i, 0], carry[i, 1]
            gates = (hx @ p["w_ih"][i] + p["b_ih"][i]
                     + h_prev @ p["w_hh"][i] + p["b_hh"][i])
            i_g = jax.nn.sigmoid(gates[:, 0 * H:1 * H])
            f_g = jax.nn.sigmoid(gates[:, 1 * H:2 * H])
            g_g = jnp.tanh(gates[:, 2 * H:3 * H])
            o_g = jax.nn.sigmoid(gates[:, 3 * H:4 * H])
            cx = f_g * c_prev + i_g * g_g
            hx = o_g * jnp.tanh(cx)
            new_states.append(jnp.stack([hx, cx]))
        a1 = jnp.maximum(hx @ p["w_a1"] + p["b_a1"], 0.0)
        res = a1 @ p["w_a2"] + p["b_a2"]
        c1 = jnp.maximum(hx @ p["w_c1"] + p["b_c1"], 0.0)
        value = (c1 @ p["w_c2"] + p["b_c2"])[:, 0]
        return jnp.stack(new_states), (res, value)

    final_states, (res_seq, val_seq) = jax.lax.scan(step, states, xs)
    return res_seq, val_seq, final_states


if __name__ == "__main__":
    batch, input_size, hidden_size, output_size, n_layers = 2, 8, 32, 6, 1
    seq_len = 8

    key = jax.random.PRNGKey(0)
    k_x, k_p = jax.random.split(key)

    params = init_params(k_p, input_size, hidden_size, output_size, n_layers)
    fused = fuse_params(params)

    xs = jax.random.normal(k_x, (seq_len, batch, input_size), jnp.float32)
    states = jnp.zeros((n_layers, 2, batch, hidden_size), jnp.float32)  # get_zeros_initial_state

    # fused rollout: ONE pallas_call / grid step for the whole T-step recurrence
    res_seq, val_seq, out_states = acmodel_rollout(xs, states, fused)
    jax.block_until_ready((res_seq, val_seq, out_states))
    assert res_seq.shape == (seq_len, batch, output_size)
    assert val_seq.shape == (seq_len, batch)
    assert out_states.shape == (n_layers, 2, batch, hidden_size)

    # single-step API matching ACModel.forward
    res1, val1, st1 = acmodel_forward(xs[0], states, fused)
    jax.block_until_ready((res1, val1, st1))
    assert res1.shape == (batch, output_size)
    assert val1.shape == (batch,)
    assert st1.shape == (n_layers, 2, batch, hidden_size)

    # correctness vs. plain-JAX reference of the PyTorch module
    res_r, val_r, st_r = acmodel_reference(xs, states, params)
    assert jnp.allclose(res_seq, res_r, atol=2e-3, rtol=2e-3)
    assert jnp.allclose(val_seq, val_r, atol=2e-3, rtol=2e-3)
    assert jnp.allclose(out_states, st_r, atol=2e-3, rtol=2e-3)
    assert jnp.allclose(res1, res_r[0], atol=2e-3, rtol=2e-3)
    assert jnp.allclose(val1, val_r[0], atol=2e-3, rtol=2e-3)

    # second config: 2 stacked LSTM layers + non-zero initial state (exercises the
    # recurrent i>0 layer path and the initial-state copy-in)
    n_layers2 = 2
    params2 = init_params(jax.random.PRNGKey(1), input_size, hidden_size,
                          output_size, n_layers2)
    fused2 = fuse_params(params2)
    states2 = 0.3 * jax.random.normal(jax.random.PRNGKey(2),
                                      (n_layers2, 2, batch, hidden_size), jnp.float32)
    r2, v2, s2 = acmodel_rollout(xs, states2, fused2)
    jax.block_until_ready((r2, v2, s2))
    rr2, vr2, sr2 = acmodel_reference(xs, states2, params2)
    assert jnp.allclose(r2, rr2, atol=2e-3, rtol=2e-3)
    assert jnp.allclose(v2, vr2, atol=2e-3, rtol=2e-3)
    assert jnp.allclose(s2, sr2, atol=2e-3, rtol=2e-3)

    print("KERNEL_OK")
</pallas_src>

<mosaic_0001>
module attributes {stable_mosaic.version = 11 : i64} {
  func.func @kernel(%arg0: i32, %arg1: memref<64x8xf32, #tpu.memory_space<vmem>>, %arg2: memref<1x8x64xf32, #tpu.memory_space<vmem>>, %arg3: memref<8x32xf32, #tpu.memory_space<vmem>>, %arg4: memref<1x32xf32, #tpu.memory_space<vmem>>, %arg5: memref<1x32x128xf32, #tpu.memory_space<vmem>>, %arg6: memref<1x32x128xf32, #tpu.memory_space<vmem>>, %arg7: memref<1x1x128xf32, #tpu.memory_space<vmem>>, %arg8: memref<32x128xf32, #tpu.memory_space<vmem>>, %arg9: memref<1x128xf32, #tpu.memory_space<vmem>>, %arg10: memref<128x128xf32, #tpu.memory_space<vmem>>, %arg11: memref<1x128xf32, #tpu.memory_space<vmem>>, %arg12: memref<64x128xf32, #tpu.memory_space<vmem>>, %arg13: memref<1x8x64xf32, #tpu.memory_space<vmem>>, %arg14: memref<64x32xf32, #tpu.memory_space<vmem>>) attributes {dimension_semantics = [#tpu.dimension_semantics<arbitrary>], iteration_bounds = array<i64: 1>, scalar_prefetch = 0 : i64, scratch_operands = 1 : i64, tpu.core_type = #tpu.core_type<tc>, window_params = [{transform_indices = @transform_0, window_bounds = array<i64: 64, 8>}, {pipeline_mode = #tpu.pipeline_mode<synchronous>, transform_indices = @transform_1, window_bounds = array<i64: 1, 8, 64>}, {pipeline_mode = #tpu.pipeline_mode<synchronous>, transform_indices = @transform_2, window_bounds = array<i64: 8, 32>}, {pipeline_mode = #tpu.pipeline_mode<synchronous>, transform_indices = @transform_3, window_bounds = array<i64: 1, 32>}, {pipeline_mode = #tpu.pipeline_mode<synchronous>, transform_indices = @transform_4, window_bounds = array<i64: 1, 32, 128>}, {pipeline_mode = #tpu.pipeline_mode<synchronous>, transform_indices = @transform_5, window_bounds = array<i64: 1, 32, 128>}, {pipeline_mode = #tpu.pipeline_mode<synchronous>, transform_indices = @transform_6, window_bounds = array<i64: 1, 1, 128>}, {pipeline_mode = #tpu.pipeline_mode<synchronous>, transform_indices = @transform_7, window_bounds = array<i64: 32, 128>}, {pipeline_mode = #tpu.pipeline_mode<synchronous>, transform_indices = @transform_8, window_bounds = array<i64: 1, 128>}, {pipeline_mode = #tpu.pipeline_mode<synchronous>, transform_indices = @transform_9, window_bounds = array<i64: 128, 128>}, {pipeline_mode = #tpu.pipeline_mode<synchronous>, transform_indices = @transform_10, window_bounds = array<i64: 1, 128>}, {transform_indices = @transform_11, window_bounds = array<i64: 64, 128>}, {pipeline_mode = #tpu.pipeline_mode<synchronous>, transform_indices = @transform_12, window_bounds = array<i64: 1, 8, 64>}]} {
    %c0_i32 = arith.constant 0 : i32
    %0 = arith.cmpi eq, %arg0, %c0_i32 : i32
    %1 = arith.extui %0 : i1 to i32
    %c0_i32_0 = arith.constant 0 : i32
    %2 = arith.cmpi ne, %1, %c0_i32_0 : i32
    scf.if %2 {
      %c0_89 = arith.constant 0 : index
      %c0_90 = arith.constant 0 : index
      %c0_91 = arith.constant 0 : index
      %216 = vector.load %arg2[%c0_89, %c0_90, %c0_91] : memref<1x8x64xf32, #tpu.memory_space<vmem>>, vector<1x8x64xf32>
      %c0_92 = arith.constant 0 : index
      %c0_93 = arith.constant 0 : index
      %c0_94 = arith.constant 0 : index
      %217 = vector.load %arg13[%c0_92, %c0_93, %c0_94] : memref<1x8x64xf32, #tpu.memory_space<vmem>>, vector<1x8x64xf32>
      tpu.vector_store %arg13[%c0_92, %c0_93, %c0_94], %216 {strides = array<i32>} : memref<1x8x64xf32, #tpu.memory_space<vmem>>, vector<1x8x64xf32>,
    } else {
    }
    %c0 = arith.constant 0 : index
    %c0_1 = arith.constant 0 : index
    %3 = vector.load %arg1[%c0, %c0_1] : memref<64x8xf32, #tpu.memory_space<vmem>>, vector<64x8xf32>
    %c0_2 = arith.constant 0 : index
    %c0_3 = arith.constant 0 : index
    %4 = vector.load %arg3[%c0_2, %c0_3] : memref<8x32xf32, #tpu.memory_space<vmem>>, vector<8x32xf32>
    %cst = arith.constant dense<0.000000e+00> : vector<64x32xf32>
    %5 = tpu.matmul %3, %4, %cst {dimension_numbers = #tpu.dot_dimension_numbers<[1], [0], [0], [1], [0, 0, 1, 1], [], []>} : vector<64x8xf32>, vector<8x32xf32>, vector<64x32xf32> -> vector<64x32xf32>
    %c0_4 = arith.constant 0 : index
    %c0_5 = arith.constant 0 : index
    %6 = vector.load %arg4[%c0_4, %c0_5] : memref<1x32xf32, #tpu.memory_space<vmem>>, vector<1x32xf32>
    %7 = vector.broadcast %6 : vector<1x32xf32> to vector<64x32xf32>
    %8 = arith.addf %5, %7 : vector<64x32xf32>
    %c0_6 = arith.constant 0 : index
    %c0_7 = arith.constant 0 : index
    %c0_8 = arith.constant 0 : index
    %9 = vector.load %arg5[%c0_6, %c0_7, %c0_8] : memref<1x32x128xf32, #tpu.memory_space<vmem>>, vector<1x32x128xf32>
    %10 = vector.shape_cast %9 : vector<1x32x128xf32> to vector<32x128xf32>
    %cst_9 = arith.constant dense<0.000000e+00> : vector<64x128xf32>
    %11 = tpu.matmul %8, %10, %cst_9 {dimension_numbers = #tpu.dot_dimension_numbers<[1], [0], [0], [1], [0, 0, 1, 1], [], []>} : vector<64x32xf32>, vector<32x128xf32>, vector<64x128xf32> -> vector<64x128xf32>
    %c0_10 = arith.constant 0 : index
    %c0_11 = arith.constant 0 : index
    %c0_12 = arith.constant 0 : index
    %12 = vector.load %arg7[%c0_10, %c0_11, %c0_12] : memref<1x1x128xf32, #tpu.memory_space<vmem>>, vector<1x1x128xf32>
    %13 = vector.shape_cast %12 : vector<1x1x128xf32> to vector<1x128xf32>
    %14 = vector.broadcast %13 : vector<1x128xf32> to vector<64x128xf32>
    %15 = arith.addf %11, %14 : vector<64x128xf32>
    %c0_13 = arith.constant 0 : index
    %c0_14 = arith.constant 0 : index
    %c0_15 = arith.constant 0 : index
    %16 = vector.load %arg13[%c0_13, %c0_14, %c0_15] : memref<1x8x64xf32, #tpu.memory_space<vmem>>, vector<1x8x32xf32>
    %17 = vector.shape_cast %16 : vector<1x8x32xf32> to vector<8x32xf32>
    %c0_16 = arith.constant 0 : index
    %c0_17 = arith.constant 0 : index
    %c32 = arith.constant 32 : index
    %18 = vector.load %arg13[%c0_16, %c0_17, %c32] : memref<1x8x64xf32, #tpu.memory_space<vmem>>, vector<1x8x32xf32>
    %19 = vector.shape_cast %18 : vector<1x8x32xf32> to vector<8x32xf32>
    %20 = vector.extract_strided_slice %15 {offsets = [0, 0], sizes = [8, 128], strides = [1, 1]} : vector<64x128xf32> to vector<8x128xf32>
    %c0_18 = arith.constant 0 : index
    %c0_19 = arith.constant 0 : index
    %c0_20 = arith.constant 0 : index
    %21 = vector.load %arg6[%c0_18, %c0_19, %c0_20] : memref<1x32x128xf32, #tpu.memory_space<vmem>>, vector<1x32x128xf32>
    %22 = vector.shape_cast %21 : vector<1x32x128xf32> to vector<32x128xf32>
    %cst_21 = arith.constant dense<0.000000e+00> : vector<8x128xf32>
    %23 = tpu.matmul %17, %22, %cst_21 {dimension_numbers = #tpu.dot_dimension_numbers<[1], [0], [0], [1], [0, 0, 1, 1], [], []>} : vector<8x32xf32>, vector<32x128xf32>, vector<8x128xf32> -> vector<8x128xf32>
    %24 = arith.addf %20, %23 : vector<8x128xf32>
    %25 = vector.extract_strided_slice %24 {offsets = [0, 0], sizes = [8, 96], strides = [1, 1]} : vector<8x128xf32> to vector<8x96xf32>
    %26 = arith.negf %25 : vector<8x96xf32>
    %27 = math.exp %26 : vector<8x96xf32>
    %cst_22 = arith.constant 1.000000e+00 : f32
    %28 = vector.broadcast %cst_22 : f32 to vector<8x96xf32>
    %29 = arith.addf %28, %27 : vector<8x96xf32>
    %30 = arith.divf %28, %29 : vector<8x96xf32>
    %31 = vector.extract_strided_slice %30 {offsets = [0, 0], sizes = [8, 32], strides = [1, 1]} : vector<8x96xf32> to vector<8x32xf32>
    %32 = vector.extract_strided_slice %30 {offsets = [0, 32], sizes = [8, 32], strides = [1, 1]} : vector<8x96xf32> to vector<8x32xf32>
    %33 = vector.extract_strided_slice %30 {offsets = [0, 64], sizes = [8, 32], strides = [1, 1]} : vector<8x96xf32> to vector<8x32xf32>
    %34 = vector.extract_strided_slice %24 {offsets = [0, 96], sizes = [8, 32], strides = [1, 1]} : vector<8x128xf32> to vector<8x32xf32>
    %35 = math.tanh %34 : vector<8x32xf32>
    %36 = arith.mulf %32, %19 : vector<8x32xf32>
    %37 = arith.mulf %31, %35 : vector<8x32xf32>
    %38 = arith.addf %36, %37 : vector<8x32xf32>
    %39 = math.tanh %38 : vector<8x32xf32>
    %40 = arith.mulf %33, %39 : vector<8x32xf32>
    %c0_23 = arith.constant 0 : index
    %c0_24 = arith.constant 0 : index
    %41 = vector.load %arg14[%c0_23, %c0_24] : memref<64x32xf32, #tpu.memory_space<vmem>>, vector<8x32xf32>
    tpu.vector_store %arg14[%c0_23, %c0_24], %40 {strides = array<i32>} : memref<64x32xf32, #tpu.memory_space<vmem>>, vector<8x32xf32>,
    %42 = vector.extract_strided_slice %15 {offsets = [8, 0], sizes = [8, 128], strides = [1, 1]} : vector<64x128xf32> to vector<8x128xf32>
    %c0_25 = arith.constant 0 : index
    %c0_26 = arith.constant 0 : index
    %c0_27 = arith.constant 0 : index
    %43 = vector.load %arg6[%c0_25, %c0_26, %c0_27] : memref<1x32x128xf32, #tpu.memory_space<vmem>>, vector<1x32x128xf32>
    %44 = vector.shape_cast %43 : vector<1x32x128xf32> to vector<32x128xf32>
    %cst_28 = arith.constant dense<0.000000e+00> : vector<8x128xf32>
    %45 = tpu.matmul %40, %44, %cst_28 {dimension_numbers = #tpu.dot_dimension_numbers<[1], [0], [0], [1], [0, 0, 1, 1], [], []>} : vector<8x32xf32>, vector<32x128xf32>, vector<8x128xf32> -> vector<8x128xf32>
    %46 = arith.addf %42, %45 : vector<8x128xf32>
    %47 = vector.extract_strided_slice %46 {offsets = [0, 0], sizes = [8, 96], strides = [1, 1]} : vector<8x128xf32> to vector<8x96xf32>
    %48 = arith.negf %47 : vector<8x96xf32>
    %49 = math.exp %48 : vector<8x96xf32>
    %cst_29 = arith.constant 1.000000e+00 : f32
    %50 = vector.broadcast %cst_29 : f32 to vector<8x96xf32>
    %51 = arith.addf %50, %49 : vector<8x96xf32>
    %52 = arith.divf %50, %51 : vector<8x96xf32>
    %53 = vector.extract_strided_slice %52 {offsets = [0, 0], sizes = [8, 32], strides = [1, 1]} : vector<8x96xf32> to vector<8x32xf32>
    %54 = vector.extract_strided_slice %52 {offsets = [0, 32], sizes = [8, 32], strides = [1, 1]} : vector<8x96xf32> to vector<8x32xf32>
    %55 = vector.extract_strided_slice %52 {offsets = [0, 64], sizes = [8, 32], strides = [1, 1]} : vector<8x96xf32> to vector<8x32xf32>
    %56 = vector.extract_strided_slice %46 {offsets = [0, 96], sizes = [8, 32], strides = [1, 1]} : vector<8x128xf32> to vector<8x32xf32>
    %57 = math.tanh %56 : vector<8x32xf32>
    %58 = arith.mulf %54, %38 : vector<8x32xf32>
    %59 = arith.mulf %53, %57 : vector<8x32xf32>
    %60 = arith.addf %58, %59 : vector<8x32xf32>
    %61 = math.tanh %60 : vector<8x32xf32>
    %62 = arith.mulf %55, %61 : vector<8x32xf32>
    %c8 = arith.constant 8 : index
    %c0_30 = arith.constant 0 : index
    %63 = vector.load %arg14[%c8, %c0_30] : memref<64x32xf32, #tpu.memory_space<vmem>>, vector<8x32xf32>
    tpu.vector_store %arg14[%c8, %c0_30], %62 {strides = array<i32>} : memref<64x32xf32, #tpu.memory_space<vmem>>, vector<8x32xf32>,
    %64 = vector.extract_strided_slice %15 {offsets = [16, 0], sizes = [8, 128], strides = [1, 1]} : vector<64x128xf32> to vector<8x128xf32>
    %c0_31 = arith.constant 0 : index
    %c0_32 = arith.constant 0 : index
    %c0_33 = arith.constant 0 : index
    %65 = vector.load %arg6[%c0_31, %c0_32, %c0_33] : memref<1x32x128xf32, #tpu.memory_space<vmem>>, vector<1x32x128xf32>
    %66 = vector.shape_cast %65 : vector<1x32x128xf32> to vector<32x128xf32>
    %cst_34 = arith.constant dense<0.000000e+00> : vector<8x128xf32>
    %67 = tpu.matmul %62, %66, %cst_34 {dimension_numbers = #tpu.dot_dimension_numbers<[1], [0], [0], [1], [0, 0, 1, 1], [], []>} : vector<8x32xf32>, vector<32x128xf32>, vector<8x128xf32> -> vector<8x128xf32>
    %68 = arith.addf %64, %67 : vector<8x128xf32>
    %69 = vector.extract_strided_slice %68 {offsets = [0, 0], sizes = [8, 96], strides = [1, 1]} : vector<8x128xf32> to vector<8x96xf32>
    %70 = arith.negf %69 : vector<8x96xf32>
    %71 = math.exp %70 : vector<8x96xf32>
    %cst_35 = arith.constant 1.000000e+00 : f32
    %72 = vector.broadcast %cst_35 : f32 to vector<8x96xf32>
    %73 = arith.addf %72, %71 : vector<8x96xf32>
    %74 = arith.divf %72, %73 : vector<8x96xf32>
    %75 = vector.extract_strided_slice %74 {offsets = [0, 0], sizes = [8, 32], strides = [1, 1]} : vector<8x96xf32> to vector<8x32xf32>
    %76 = vector.extract_strided_slice %74 {offsets = [0, 32], sizes = [8, 32], strides = [1, 1]} : vector<8x96xf32> to vector<8x32xf32>
    %77 = vector.extract_strided_slice %74 {offsets = [0, 64], sizes = [8, 32], strides = [1, 1]} : vector<8x96xf32> to vector<8x32xf32>
    %78 = vector.extract_strided_slice %68 {offsets = [0, 96], sizes = [8, 32], strides = [1, 1]} : vector<8x128xf32> to vector<8x32xf32>
    %79 = math.tanh %78 : vector<8x32xf32>
    %80 = arith.mulf %76, %60 : vector<8x32xf32>
    %81 = arith.mulf %75, %79 : vector<8x32xf32>
    %82 = arith.addf %80, %81 : vector<8x32xf32>
    %83 = math.tanh %82 : vector<8x32xf32>
    %84 = arith.mulf %77, %83 : vector<8x32xf32>
    %c16 = arith.constant 16 : index
    %c0_36 = arith.constant 0 : index
    %85 = vector.load %arg14[%c16, %c0_36] : memref<64x32xf32, #tpu.memory_space<vmem>>, vector<8x32xf32>
    tpu.vector_store %arg14[%c16, %c0_36], %84 {strides = array<i32>} : memref<64x32xf32, #tpu.memory_space<vmem>>, vector<8x32xf32>,
    %86 = vector.extract_strided_slice %15 {offsets = [24, 0], sizes = [8, 128], strides = [1, 1]} : vector<64x128xf32> to vector<8x128xf32>
    %c0_37 = arith.constant 0 : index
    %c0_38 = arith.constant 0 : index
    %c0_39 = arith.constant 0 : index
    %87 = vector.load %arg6[%c0_37, %c0_38, %c0_39] : memref<1x32x128xf32, #tpu.memory_space<vmem>>, vector<1x32x128xf32>
    %88 = vector.shape_cast %87 : vector<1x32x128xf32> to vector<32x128xf32>
    %cst_40 = arith.constant dense<0.000000e+00> : vector<8x128xf32>
    %89 = tpu.matmul %84, %88, %cst_40 {dimension_numbers = #tpu.dot_dimension_numbers<[1], [0], [0], [1], [0, 0, 1, 1], [], []>} : vector<8x32xf32>, vector<32x128xf32>, vector<8x128xf32> -> vector<8x128xf32>
    %90 = arith.addf %86, %89 : vector<8x128xf32>
    %91 = vector.extract_strided_slice %90 {offsets = [0, 0], sizes = [8, 96], strides = [1, 1]} : vector<8x128xf32> to vector<8x96xf32>
    %92 = arith.negf %91 : vector<8x96xf32>
    %93 = math.exp %92 : vector<8x96xf32>
    %cst_41 = arith.constant 1.000000e+00 : f32
    %94 = vector.broadcast %cst_41 : f32 to vector<8x96xf32>
    %95 = arith.addf %94, %93 : vector<8x96xf32>
    %96 = arith.divf %94, %95 : vector<8x96xf32>
    %97 = vector.extract_strided_slice %96 {offsets = [0, 0], sizes = [8, 32], strides = [1, 1]} : vector<8x96xf32> to vector<8x32xf32>
    %98 = vector.extract_strided_slice %96 {offsets = [0, 32], sizes = [8, 32], strides = [1, 1]} : vector<8x96xf32> to vector<8x32xf32>
    %99 = vector.extract_strided_slice %96 {offsets = [0, 64], sizes = [8, 32], strides = [1, 1]} : vector<8x96xf32> to vector<8x32xf32>
    %100 = vector.extract_strided_slice %90 {offsets = [0, 96], sizes = [8, 32], strides = [1, 1]} : vector<8x128xf32> to vector<8x32xf32>
    %101 = math.tanh %100 : vector<8x32xf32>
    %102 = arith.mulf %98, %82 : vector<8x32xf32>
    %103 = arith.mulf %97, %101 : vector<8x32xf32>
    %104 = arith.addf %102, %103 : vector<8x32xf32>
    %105 = math.tanh %104 : vector<8x32xf32>
    %106 = arith.mulf %99, %105 : vector<8x32xf32>
    %c24 = arith.constant 24 : index
    %c0_42 = arith.constant 0 : index
    %107 = vector.load %arg14[%c24, %c0_42] : memref<64x32xf32, #tpu.memory_space<vmem>>, vector<8x32xf32>
    tpu.vector_store %arg14[%c24, %c0_42], %106 {strides = array<i32>} : memref<64x32xf32, #tpu.memory_space<vmem>>, vector<8x32xf32>,
    %108 = vector.extract_strided_slice %15 {offsets = [32, 0], sizes = [8, 128], strides = [1, 1]} : vector<64x128xf32> to vector<8x128xf32>
    %c0_43 = arith.constant 0 : index
    %c0_44 = arith.constant 0 : index
    %c0_45 = arith.constant 0 : index
    %109 = vector.load %arg6[%c0_43, %c0_44, %c0_45] : memref<1x32x128xf32, #tpu.memory_space<vmem>>, vector<1x32x128xf32>
    %110 = vector.shape_cast %109 : vector<1x32x128xf32> to vector<32x128xf32>
    %cst_46 = arith.constant dense<0.000000e+00> : vector<8x128xf32>
    %111 = tpu.matmul %106, %110, %cst_46 {dimension_numbers = #tpu.dot_dimension_numbers<[1], [0], [0], [1], [0, 0, 1, 1], [], []>} : vector<8x32xf32>, vector<32x128xf32>, vector<8x128xf32> -> vector<8x128xf32>
    %112 = arith.addf %108, %111 : vector<8x128xf32>
    %113 = vector.extract_strided_slice %112 {offsets = [0, 0], sizes = [8, 96], strides = [1, 1]} : vector<8x128xf32> to vector<8x96xf32>
    %114 = arith.negf %113 : vector<8x96xf32>
    %115 = math.exp %114 : vector<8x96xf32>
    %cst_47 = arith.constant 1.000000e+00 : f32
    %116 = vector.broadcast %cst_47 : f32 to vector<8x96xf32>
    %117 = arith.addf %116, %115 : vector<8x96xf32>
    %118 = arith.divf %116, %117 : vector<8x96xf32>
    %119 = vector.extract_strided_slice %118 {offsets = [0, 0], sizes = [8, 32], strides = [1, 1]} : vector<8x96xf32> to vector<8x32xf32>
    %120 = vector.extract_strided_slice %118 {offsets = [0, 32], sizes = [8, 32], strides = [1, 1]} : vector<8x96xf32> to vector<8x32xf32>
    %121 = vector.extract_strided_slice %118 {offsets = [0, 64], sizes = [8, 32], strides = [1, 1]} : vector<8x96xf32> to vector<8x32xf32>
    %122 = vector.extract_strided_slice %112 {offsets = [0, 96], sizes = [8, 32], strides = [1, 1]} : vector<8x128xf32> to vector<8x32xf32>
    %123 = math.tanh %122 : vector<8x32xf32>
    %124 = arith.mulf %120, %104 : vector<8x32xf32>
    %125 = arith.mulf %119, %123 : vector<8x32xf32>
    %126 = arith.addf %124, %125 : vector<8x32xf32>
    %127 = math.tanh %126 : vector<8x32xf32>
    %128 = arith.mulf %121, %127 : vector<8x32xf32>
    %c32_48 = arith.constant 32 : index
    %c0_49 = arith.constant 0 : index
    %129 = vector.load %arg14[%c32_48, %c0_49] : memref<64x32xf32, #tpu.memory_space<vmem>>, vector<8x32xf32>
    tpu.vector_store %arg14[%c32_48, %c0_49], %128 {strides = array<i32>} : memref<64x32xf32, #tpu.memory_space<vmem>>, vector<8x32xf32>,
    %130 = vector.extract_strided_slice %15 {offsets = [40, 0], sizes = [8, 128], strides = [1, 1]} : vector<64x128xf32> to vector<8x128xf32>
    %c0_50 = arith.constant 0 : index
    %c0_51 = arith.constant 0 : index
    %c0_52 = arith.constant 0 : index
    %131 = vector.load %arg6[%c0_50, %c0_51, %c0_52] : memref<1x32x128xf32, #tpu.memory_space<vmem>>, vector<1x32x128xf32>
    %132 = vector.shape_cast %131 : vector<1x32x128xf32> to vector<32x128xf32>
    %cst_53 = arith.constant dense<0.000000e+00> : vector<8x128xf32>
    %133 = tpu.matmul %128, %132, %cst_53 {dimension_numbers = #tpu.dot_dimension_numbers<[1], [0], [0], [1], [0, 0, 1, 1], [], []>} : vector<8x32xf32>, vector<32x128xf32>, vector<8x128xf32> -> vector<8x128xf32>
    %134 = arith.addf %130, %133 : vector<8x128xf32>
    %135 = vector.extract_strided_slice %134 {offsets = [0, 0], sizes = [8, 96], strides = [1, 1]} : vector<8x128xf32> to vector<8x96xf32>
    %136 = arith.negf %135 : vector<8x96xf32>
    %137 = math.exp %136 : vector<8x96xf32>
    %cst_54 = arith.constant 1.000000e+00 : f32
    %138 = vector.broadcast %cst_54 : f32 to vector<8x96xf32>
    %139 = arith.addf %138, %137 : vector<8x96xf32>
    %140 = arith.divf %138, %139 : vector<8x96xf32>
    %141 = vector.extract_strided_slice %140 {offsets = [0, 0], sizes = [8, 32], strides = [1, 1]} : vector<8x96xf32> to vector<8x32xf32>
    %142 = vector.extract_strided_slice %140 {offsets = [0, 32], sizes = [8, 32], strides = [1, 1]} : vector<8x96xf32> to vector<8x32xf32>
    %143 = vector.extract_strided_slice %140 {offsets = [0, 64], sizes = [8, 32], strides = [1, 1]} : vector<8x96xf32> to vector<8x32xf32>
    %144 = vector.extract_strided_slice %134 {offsets = [0, 96], sizes = [8, 32], strides = [1, 1]} : vector<8x128xf32> to vector<8x32xf32>
    %145 = math.tanh %144 : vector<8x32xf32>
    %146 = arith.mulf %142, %126 : vector<8x32xf32>
    %147 = arith.mulf %141, %145 : vector<8x32xf32>
    %148 = arith.addf %146, %147 : vector<8x32xf32>
    %149 = math.tanh %148 : vector<8x32xf32>
    %150 = arith.mulf %143, %149 : vector<8x32xf32>
    %c40 = arith.constant 40 : index
    %c0_55 = arith.constant 0 : index
    %151 = vector.load %arg14[%c40, %c0_55] : memref<64x32xf32, #tpu.memory_space<vmem>>, vector<8x32xf32>
    tpu.vector_store %arg14[%c40, %c0_55], %150 {strides = array<i32>} : memref<64x32xf32, #tpu.memory_space<vmem>>, vector<8x32xf32>,
    %152 = vector.extract_strided_slice %15 {offsets = [48, 0], sizes = [8, 128], strides = [1, 1]} : vector<64x128xf32> to vector<8x128xf32>
    %c0_56 = arith.constant 0 : index
    %c0_57 = arith.constant 0 : index
    %c0_58 = arith.constant 0 : index
    %153 = vector.load %arg6[%c0_56, %c0_57, %c0_58] : memref<1x32x128xf32, #tpu.memory_space<vmem>>, vector<1x32x128xf32>
    %154 = vector.shape_cast %153 : vector<1x32x128xf32> to vector<32x128xf32>
    %cst_59 = arith.constant dense<0.000000e+00> : vector<8x128xf32>
    %155 = tpu.matmul %150, %154, %cst_59 {dimension_numbers = #tpu.dot_dimension_numbers<[1], [0], [0], [1], [0, 0, 1, 1], [], []>} : vector<8x32xf32>, vector<32x128xf32>, vector<8x128xf32> -> vector<8x128xf32>
    %156 = arith.addf %152, %155 : vector<8x128xf32>
    %157 = vector.extract_strided_slice %156 {offsets = [0, 0], sizes = [8, 96], strides = [1, 1]} : vector<8x128xf32> to vector<8x96xf32>
    %158 = arith.negf %157 : vector<8x96xf32>
    %159 = math.exp %158 : vector<8x96xf32>
    %cst_60 = arith.constant 1.000000e+00 : f32
    %160 = vector.broadcast %cst_60 : f32 to vector<8x96xf32>
    %161 = arith.addf %160, %159 : vector<8x96xf32>
    %162 = arith.divf %160, %161 : vector<8x96xf32>
    %163 = vector.extract_strided_slice %162 {offsets = [0, 0], sizes = [8, 32], strides = [1, 1]} : vector<8x96xf32> to vector<8x32xf32>
    %164 = vector.extract_strided_slice %162 {offsets = [0, 32], sizes = [8, 32], strides = [1, 1]} : vector<8x96xf32> to vector<8x32xf32>
    %165 = vector.extract_strided_slice %162 {offsets = [0, 64], sizes = [8, 32], strides = [1, 1]} : vector<8x96xf32> to vector<8x32xf32>
    %166 = vector.extract_strided_slice %156 {offsets = [0, 96], sizes = [8, 32], strides = [1, 1]} : vector<8x128xf32> to vector<8x32xf32>
    %167 = math.tanh %166 : vector<8x32xf32>
    %168 = arith.mulf %164, %148 : vector<8x32xf32>
    %169 = arith.mulf %163, %167 : vector<8x32xf32>
    %170 = arith.addf %168, %169 : vector<8x32xf32>
    %171 = math.tanh %170 : vector<8x32xf32>
    %172 = arith.mulf %165, %171 : vector<8x32xf32>
    %c48 = arith.constant 48 : index
    %c0_61 = arith.constant 0 : index
    %173 = vector.load %arg14[%c48, %c0_61] : memref<64x32xf32, #tpu.memory_space<vmem>>, vector<8x32xf32>
    tpu.vector_store %arg14[%c48, %c0_61], %172 {strides = array<i32>} : memref<64x32xf32, #tpu.memory_space<vmem>>, vector<8x32xf32>,
    %174 = vector.extract_strided_slice %15 {offsets = [56, 0], sizes = [8, 128], strides = [1, 1]} : vector<64x128xf32> to vector<8x128xf32>
    %c0_62 = arith.constant 0 : index
    %c0_63 = arith.constant 0 : index
    %c0_64 = arith.constant 0 : index
    %175 = vector.load %arg6[%c0_62, %c0_63, %c0_64] : memref<1x32x128xf32, #tpu.memory_space<vmem>>, vector<1x32x128xf32>
    %176 = vector.shape_cast %175 : vector<1x32x128xf32> to vector<32x128xf32>
    %cst_65 = arith.constant dense<0.000000e+00> : vector<8x128xf32>
    %177 = tpu.matmul %172, %176, %cst_65 {dimension_numbers = #tpu.dot_dimension_numbers<[1], [0], [0], [1], [0, 0, 1, 1], [], []>} : vector<8x32xf32>, vector<32x128xf32>, vector<8x128xf32> -> vector<8x128xf32>
    %178 = arith.addf %174, %177 : vector<8x128xf32>
    %179 = vector.extract_strided_slice %178 {offsets = [0, 0], sizes = [8, 96], strides = [1, 1]} : vector<8x128xf32> to vector<8x96xf32>
    %180 = arith.negf %179 : vector<8x96xf32>
    %181 = math.exp %180 : vector<8x96xf32>
    %cst_66 = arith.constant 1.000000e+00 : f32
    %182 = vector.broadcast %cst_66 : f32 to vector<8x96xf32>
    %183 = arith.addf %182, %181 : vector<8x96xf32>
    %184 = arith.divf %182, %183 : vector<8x96xf32>
    %185 = vector.extract_strided_slice %184 {offsets = [0, 0], sizes = [8, 32], strides = [1, 1]} : vector<8x96xf32> to vector<8x32xf32>
    %186 = vector.extract_strided_slice %184 {offsets = [0, 32], sizes = [8, 32], strides = [1, 1]} : vector<8x96xf32> to vector<8x32xf32>
    %187 = vector.extract_strided_slice %184 {offsets = [0, 64], sizes = [8, 32], strides = [1, 1]} : vector<8x96xf32> to vector<8x32xf32>
    %188 = vector.extract_strided_slice %178 {offsets = [0, 96], sizes = [8, 32], strides = [1, 1]} : vector<8x128xf32> to vector<8x32xf32>
    %189 = math.tanh %188 : vector<8x32xf32>
    %190 = arith.mulf %186, %170 : vector<8x32xf32>
    %191 = arith.mulf %185, %189 : vector<8x32xf32>
    %192 = arith.addf %190, %191 : vector<8x32xf32>
    %193 = math.tanh %192 : vector<8x32xf32>
    %194 = arith.mulf %187, %193 : vector<8x32xf32>
    %c56 = arith.constant 56 : index
    %c0_67 = arith.constant 0 : index
    %195 = vector.load %arg14[%c56, %c0_67] : memref<64x32xf32, #tpu.memory_space<vmem>>, vector<8x32xf32>
    tpu.vector_store %arg14[%c56, %c0_67], %194 {strides = array<i32>} : memref<64x32xf32, #tpu.memory_space<vmem>>, vector<8x32xf32>,
    %c0_68 = arith.constant 0 : index
    %c0_69 = arith.constant 0 : index
    %c0_70 = arith.constant 0 : index
    %196 = vector.load %arg13[%c0_68, %c0_69, %c0_70] : memref<1x8x64xf32, #tpu.memory_space<vmem>>, vector<1x8x32xf32>
    %197 = vector.shape_cast %196 : vector<1x8x32xf32> to vector<8x32xf32>
    %198 = vector.shape_cast %194 : vector<8x32xf32> to vector<1x8x32xf32>
    tpu.vector_store %arg13[%c0_68, %c0_69, %c0_70], %198 {strides = array<i32>} : memref<1x8x64xf32, #tpu.memory_space<vmem>>, vector<1x8x32xf32>,
    %c0_71 = arith.constant 0 : index
    %c0_72 = arith.constant 0 : index
    %c32_73 = arith.constant 32 : index
    %199 = vector.load %arg13[%c0_71, %c0_72, %c32_73] : memref<1x8x64xf32, #tpu.memory_space<vmem>>, vector<1x8x32xf32>
    %200 = vector.shape_cast %199 : vector<1x8x32xf32> to vector<8x32xf32>
    %201 = vector.shape_cast %192 : vector<8x32xf32> to vector<1x8x32xf32>
    tpu.vector_store %arg13[%c0_71, %c0_72, %c32_73], %201 {strides = array<i32>} : memref<1x8x64xf32, #tpu.memory_space<vmem>>, vector<1x8x32xf32>,
    %c0_74 = arith.constant 0 : index
    %c0_75 = arith.constant 0 : index
    %202 = vector.load %arg14[%c0_74, %c0_75] : memref<64x32xf32, #tpu.memory_space<vmem>>, vector<64x32xf32>
    %c0_76 = arith.constant 0 : index
    %c0_77 = arith.constant 0 : index
    %203 = vector.load %arg8[%c0_76, %c0_77] : memref<32x128xf32, #tpu.memory_space<vmem>>, vector<32x128xf32>
    %cst_78 = arith.constant dense<0.000000e+00> : vector<64x128xf32>
    %204 = tpu.matmul %202, %203, %cst_78 {dimension_numbers = #tpu.dot_dimension_numbers<[1], [0], [0], [1], [0, 0, 1, 1], [], []>} : vector<64x32xf32>, vector<32x128xf32>, vector<64x128xf32> -> vector<64x128xf32>
    %c0_79 = arith.constant 0 : index
    %c0_80 = arith.constant 0 : index
    %205 = vector.load %arg9[%c0_79, %c0_80] : memref<1x128xf32, #tpu.memory_space<vmem>>, vector<1x128xf32>
    %206 = vector.broadcast %205 : vector<1x128xf32> to vector<64x128xf32>
    %207 = arith.addf %204, %206 : vector<64x128xf32>
    %cst_81 = arith.constant 0.000000e+00 : f32
    %208 = vector.broadcast %cst_81 : f32 to vector<64x128xf32>
    %209 = arith.maximumf %207, %208 : vector<64x128xf32>
    %c0_82 = arith.constant 0 : index
    %c0_83 = arith.constant 0 : index
    %210 = vector.load %arg10[%c0_82, %c0_83] : memref<128x128xf32, #tpu.memory_space<vmem>>, vector<128x128xf32>
    %cst_84 = arith.constant dense<0.000000e+00> : vector<64x128xf32>
    %211 = tpu.matmul %209, %210, %cst_84 {dimension_numbers = #tpu.dot_dimension_numbers<[1], [0], [0], [1], [0, 0, 1, 1], [], []>} : vector<64x128xf32>, vector<128x128xf32>, vector<64x128xf32> -> vector<64x128xf32>
    %c0_85 = arith.constant 0 : index
    %c0_86 = arith.constant 0 : index
    %212 = vector.load %arg11[%c0_85, %c0_86] : memref<1x128xf32, #tpu.memory_space<vmem>>, vector<1x128xf32>
    %213 = vector.broadcast %212 : vector<1x128xf32> to vector<64x128xf32>
    %214 = arith.addf %211, %213 : vector<64x128xf32>
    %c0_87 = arith.constant 0 : index
    %c0_88 = arith.constant 0 : index
    %215 = vector.load %arg12[%c0_87, %c0_88] : memref<64x128xf32, #tpu.memory_space<vmem>>, vector<64x128xf32>
    tpu.vector_store %arg12[%c0_87, %c0_88], %214 {strides = array<i32>} : memref<64x128xf32, #tpu.memory_space<vmem>>, vector<64x128xf32>,
    return
  }
  func.func @transform_0(%arg0: i32) -> (i32, i32) {
    %c0_i32 = arith.constant 0 : i32
    %c0_i32_0 = arith.constant 0 : i32
    return %arg0, %c0_i32 : i32, i32
  }
  func.func @transform_1(%arg0: i32) -> (i32, i32, i32) {
    %c0_i32 = arith.constant 0 : i32
    %c0_i32_0 = arith.constant 0 : i32
    %c0_i32_1 = arith.constant 0 : i32
    %c0_i32_2 = arith.constant 0 : i32
    return %c0_i32, %c0_i32_0, %c0_i32_1 : i32, i32, i32
  }
  func.func @transform_2(%arg0: i32) -> (i32, i32) {
    %c0_i32 = arith.constant 0 : i32
    %c0_i32_0 = arith.constant 0 : i32
    %c0_i32_1 = arith.constant 0 : i32
    return %c0_i32, %c0_i32_0 : i32, i32
  }
  func.func @transform_3(%arg0: i32) -> (i32, i32) {
    %c0_i32 = arith.constant 0 : i32
    %c0_i32_0 = arith.constant 0 : i32
    %c0_i32_1 = arith.constant 0 : i32
    return %c0_i32, %c0_i32_0 : i32, i32
  }
  func.func @transform_4(%arg0: i32) -> (i32, i32, i32) {
    %c0_i32 = arith.constant 0 : i32
    %c0_i32_0 = arith.constant 0 : i32
    %c0_i32_1 = arith.constant 0 : i32
    %c0_i32_2 = arith.constant 0 : i32
    return %c0_i32, %c0_i32_0, %c0_i32_1 : i32, i32, i32
  }
  func.func @transform_5(%arg0: i32) -> (i32, i32, i32) {
    %c0_i32 = arith.constant 0 : i32
    %c0_i32_0 = arith.constant 0 : i32
    %c0_i32_1 = arith.constant 0 : i32
    %c0_i32_2 = arith.constant 0 : i32
    return %c0_i32, %c0_i32_0, %c0_i32_1 : i32, i32, i32
  }
  func.func @transform_6(%arg0: i32) -> (i32, i32, i32) {
    %c0_i32 = arith.constant 0 : i32
    %c0_i32_0 = arith.constant 0 : i32
    %c0_i32_1 = arith.constant 0 : i32
    %c0_i32_2 = arith.constant 0 : i32
    return %c0_i32, %c0_i32_0, %c0_i32_1 : i32, i32, i32
  }
  func.func @transform_7(%arg0: i32) -> (i32, i32) {
    %c0_i32 = arith.constant 0 : i32
    %c0_i32_0 = arith.constant 0 : i32
    %c0_i32_1 = arith.constant 0 : i32
    return %c0_i32, %c0_i32_0 : i32, i32
  }
  func.func @transform_8(%arg0: i32) -> (i32, i32) {
    %c0_i32 = arith.constant 0 : i32
    %c0_i32_0 = arith.constant 0 : i32
    %c0_i32_1 = arith.constant 0 : i32
    return %c0_i32, %c0_i32_0 : i32, i32
  }
  func.func @transform_9(%arg0: i32) -> (i32, i32) {
    %c0_i32 = arith.constant 0 : i32
    %c0_i32_0 = arith.constant 0 : i32
    %c0_i32_1 = arith.constant 0 : i32
    return %c0_i32, %c0_i32_0 : i32, i32
  }
  func.func @transform_10(%arg0: i32) -> (i32, i32) {
    %c0_i32 = arith.constant 0 : i32
    %c0_i32_0 = arith.constant 0 : i32
    %c0_i32_1 = arith.constant 0 : i32
    return %c0_i32, %c0_i32_0 : i32, i32
  }
  func.func @transform_11(%arg0: i32) -> (i32, i32) {
    %c0_i32 = arith.constant 0 : i32
    %c0_i32_0 = arith.constant 0 : i32
    return %arg0, %c0_i32 : i32, i32
  }
  func.func @transform_12(%arg0: i32) -> (i32, i32, i32) {
    %c0_i32 = arith.constant 0 : i32
    %c0_i32_0 = arith.constant 0 : i32
    %c0_i32_1 = arith.constant 0 : i32
    %c0_i32_2 = arith.constant 0 : i32
    return %c0_i32, %c0_i32_0, %c0_i32_1 : i32, i32, i32
  }
}

</mosaic_0001>

<llo_original>
// kernel: tpu_custom_call.1
$region0: #{tpu_custom_call.1}
  #allocation0 [shape = 'u32[]', space=smem, size = 0x4, offset = 0x4, fixed_abs, tag = 'smem constant byte address 0x4 - core index']
  #allocation1 [shape = 'u32[144,128]{1,0:T(1,128)}', space=vmem, size = 0x12000, scoped, tag = 'internal scratch']
  #allocation2 [shape = 'f32[64,32]{1,0:T(8,128)}', space=vmem, size = 0x8000, scoped, tag = 'scratch operand']
  %s0 = inlined_call_operand.vmem [shape: f32[64,8], index: 0, kind: input, shape index: {}]
  %s1 = inlined_call_operand.hbm [shape: f32[1,8,64], index: 1, kind: input, shape index: {}, may-alias: {1,12}]
  %s2 = inlined_call_operand.vmem [shape: f32[8,32], index: 2, kind: input, shape index: {}]
  %s3 = inlined_call_operand.vmem [shape: f32[1,32], index: 3, kind: input, shape index: {}]
  %s4 = inlined_call_operand.vmem [shape: f32[1,32,128], index: 4, kind: input, shape index: {}]
  %s5 = inlined_call_operand.vmem [shape: f32[1,32,128], index: 5, kind: input, shape index: {}]
  %s6 = inlined_call_operand.vmem [shape: f32[1,1,128], index: 6, kind: input, shape index: {}]
  %s7 = inlined_call_operand.vmem [shape: f32[32,128], index: 7, kind: input, shape index: {}]
  %s8 = inlined_call_operand.hbm [shape: f32[1,128], index: 8, kind: input, shape index: {}]
  %s9 = inlined_call_operand.hbm [shape: f32[128,128], index: 9, kind: input, shape index: {}]
  %s10 = inlined_call_operand.hbm [shape: f32[1,128], index: 10, kind: input, shape index: {}]
  %s11 = inlined_call_operand.hbm [shape: f32[64,128], index: 11, kind: output, shape index: {0}]
  %s12 = inlined_call_operand.hbm [shape: f32[1,8,64], index: 12, kind: output, shape index: {1}, may-alias: {1,12}]
  %13 = xla_tuple %s11, %s12
  %s14 = sld [smem:[#allocation0]]
  $region82: #{tpu_custom_call.1} parent=0
    _
  %s16 = ssub.s32 1, %s14
  %s17 = scalar_select 0, %s16, %s14
  $region1: #{tpu_custom_call.1} parent=0
    #allocation3 [shape = 'u8[4096]{0}', space=vmem, size = 0x1000, scoped, tag = 'input window, operand 1, single buffered']
    #allocation4 [shape = 's32[1]{0}', space=sflag, size = 0x4, scoped, tag = 'scoped memory for tpu_custom_call.1']
    #allocation5 [shape = 's32[1]{0}', space=sflag, size = 0x4, scoped, tag = 'scoped memory for tpu_custom_call.1']
    #allocation6 [shape = 'u8[512]{0}', space=vmem, size = 0x400, scoped, tag = 'input window, operand 8, single buffered']
    #allocation7 [shape = 's32[1]{0}', space=sflag, size = 0x4, scoped, tag = 'scoped memory for tpu_custom_call.1']
    #allocation8 [shape = 'u8[65536]{0}', space=vmem, size = 0x10000, scoped, tag = 'input window, operand 9, single buffered']
    #allocation9 [shape = 'u8[512]{0}', space=vmem, size = 0x400, scoped, tag = 'input window, operand 10, single buffered']
    #allocation10 [shape = 's32[1]{0}', space=sflag, size = 0x4, scoped, tag = 'scoped memory for tpu_custom_call.1']
    #allocation11 [shape = 'u8[32768]{0}', space=vmem, size = 0x8000, scoped, tag = 'output window, operand 0, single buffered']
    #allocation12 [shape = 'u8[4096]{0}', space=vmem, size = 0x1000, scoped, tag = 'output window, operand 1, single buffered']
    #allocation13 [shape = 's32[1]{0}', space=sflag, size = 0x4, scoped, tag = 'scoped memory for tpu_custom_call.1']
    %18 = vsyncpa [#allocation4], 0
    %19 = vsyncpa [#allocation7], 0
    %20 = vsyncpa [#allocation10], 0
    %21 = vsyncpa [#allocation5], 0
    %22 = vsyncpa [#allocation13], 0
    // Predicated region
    $region2: #{tpu_custom_call.1} parent=1 // pred_check
      _
    $region3: #{tpu_custom_call.1} parent=1 // pred_check_branch
      %24 = sbr.rel (0) target = $region5
    $region4: #{tpu_custom_call.1} parent=1 // pred_region
      _
    $region5: #{tpu_custom_call.1} parent=1 // pred_fallthru
      _
    // Predicated region
    $region6: #{tpu_custom_call.1} parent=1 // pred_check
      _
    $region7: #{tpu_custom_call.1} parent=1 // pred_check_branch
      %26 = sbr.rel (0) target = $region9
    $region8: #{tpu_custom_call.1} parent=1 // pred_region
      %s28 = ssub.s32 128, 128
      %29 = vsyncadd [#allocation4], %s28
      %s31 = sshll.u32 [#allocation3], 4
      %s32 = int_to_ptr.vmem [resolvable:$true] %s31
      %34 = dma.hbm_to_vmem [thread:$0]  %s1, 128, %s32, [#allocation4]
    $region9: #{tpu_custom_call.1} parent=1 // pred_fallthru
      _
    // Predicated region
    $region10: #{tpu_custom_call.1} parent=1 // pred_check
      _
    $region11: #{tpu_custom_call.1} parent=1 // pred_check_branch
      %36 = sbr.rel (0) target = $region13
    $region12: #{tpu_custom_call.1} parent=1 // pred_region
      _
    $region13: #{tpu_custom_call.1} parent=1 // pred_fallthru
      _
    // Predicated region
    $region14: #{tpu_custom_call.1} parent=1 // pred_check
      _
    $region15: #{tpu_custom_call.1} parent=1 // pred_check_branch
      %38 = sbr.rel (0) target = $region17
    $region16: #{tpu_custom_call.1} parent=1 // pred_region
      _
    $region17: #{tpu_custom_call.1} parent=1 // pred_fallthru
      _
    // Predicated region
    $region18: #{tpu_custom_call.1} parent=1 // pred_check
      _
    $region19: #{tpu_custom_call.1} parent=1 // pred_check_branch
      %40 = sbr.rel (0) target = $region21
    $region20: #{tpu_custom_call.1} parent=1 // pred_region
      _
    $region21: #{tpu_custom_call.1} parent=1 // pred_fallthru
      _
    // Predicated region
    $region22: #{tpu_custom_call.1} parent=1 // pred_check
      _
    $region23: #{tpu_custom_call.1} parent=1 // pred_check_branch
      %42 = sbr.rel (0) target = $region25
    $region24: #{tpu_custom_call.1} parent=1 // pred_region
      _
    $region25: #{tpu_custom_call.1} parent=1 // pred_fallthru
      _
    // Predicated region
    $region26: #{tpu_custom_call.1} parent=1 // pred_check
      _
    $region27: #{tpu_custom_call.1} parent=1 // pred_check_branch
      %44 = sbr.rel (0) target = $region29
    $region28: #{tpu_custom_call.1} parent=1 // pred_region
      _
    $region29: #{tpu_custom_call.1} parent=1 // pred_fallthru
      _
    // Predicated region
    $region30: #{tpu_custom_call.1} parent=1 // pred_check
      _
    $region31: #{tpu_custom_call.1} parent=1 // pred_check_branch
      %46 = sbr.rel (0) target = $region33
    $region32: #{tpu_custom_call.1} parent=1 // pred_region
      _
    $region33: #{tpu_custom_call.1} parent=1 // pred_fallthru
      _
    // Predicated region
    $region34: #{tpu_custom_call.1} parent=1 // pred_check
      _
    $region35: #{tpu_custom_call.1} parent=1 // pred_check_branch
      %48 = sbr.rel (0) target = $region37
    $region36: #{tpu_custom_call.1} parent=1 // pred_region
      %s50 = ssub.s32 16, 16
      %51 = vsyncadd [#allocation7], %s50
      %s53 = sshll.u32 [#allocation6], 4
      %s54 = int_to_ptr.vmem [resolvable:$true] %s53
      %56 = dma.hbm_to_vmem [thread:$0]  %s8, 16, %s54, [#allocation7]
    $region37: #{tpu_custom_call.1} parent=1 // pred_fallthru
      _
    // Predicated region
    $region38: #{tpu_custom_call.1} parent=1 // pred_check
      _
    $region39: #{tpu_custom_call.1} parent=1 // pred_check_branch
      %58 = sbr.rel (0) target = $region41
    $region40: #{tpu_custom_call.1} parent=1 // pred_region
      %s60 = ssub.s32 2048, 2048
      %61 = vsyncadd [#allocation7], %s60
      %s62 = sshll.u32 [#allocation8], 4
      %s63 = int_to_ptr.vmem [resolvable:$true] %s62
      %68 = dma.hbm_to_vmem [thread:$0]  %s9, 2048, %s63, [#allocation7], 128, 128, 8
    $region41: #{tpu_custom_call.1} parent=1 // pred_fallthru
      _
    // Predicated region
    $region42: #{tpu_custom_call.1} parent=1 // pred_check
      _
    $region43: #{tpu_custom_call.1} parent=1 // pred_check_branch
      %70 = sbr.rel (0) target = $region45
    $region44: #{tpu_custom_call.1} parent=1 // pred_region
      %s72 = ssub.s32 16, 16
      %73 = vsyncadd [#allocation10], %s72
      %s75 = sshll.u32 [#allocation9], 4
      %s76 = int_to_ptr.vmem [resolvable:$true] %s75
      %78 = dma.hbm_to_vmem [thread:$0]  %s10, 16, %s76, [#allocation10]
    $region45: #{tpu_custom_call.1} parent=1 // pred_fallthru
      _
    // Predicated region
    $region46: #{tpu_custom_call.1} parent=1 // pred_check
      _
    $region47: #{tpu_custom_call.1} parent=1 // pred_check_branch
      %80 = sbr.rel (0) target = $region49
    $region48: #{tpu_custom_call.1} parent=1 // pred_region
      %81 = dma.done [#allocation4], 128
    $region49: #{tpu_custom_call.1} parent=1 // pred_fallthru
      _
    // Predicated region
    $region50: #{tpu_custom_call.1} parent=1 // pred_check
      _
    $region51: #{tpu_custom_call.1} parent=1 // pred_check_branch
      %83 = sbr.rel (0) target = $region53
    $region52: #{tpu_custom_call.1} parent=1 // pred_region
      %84 = dma.done [#allocation7], 16
    $region53: #{tpu_custom_call.1} parent=1 // pred_fallthru
      _
    // Predicated region
    $region54: #{tpu_custom_call.1} parent=1 // pred_check
      _
    $region55: #{tpu_custom_call.1} parent=1 // pred_check_branch
      %86 = sbr.rel (0) target = $region57
    $region56: #{tpu_custom_call.1} parent=1 // pred_region
      %87 = dma.done [#allocation7], 2048
    $region57: #{tpu_custom_call.1} parent=1 // pred_fallthru
      _
    // Predicated region
    $region58: #{tpu_custom_call.1} parent=1 // pred_check
      _
    $region59: #{tpu_custom_call.1} parent=1 // pred_check_branch
      %89 = sbr.rel (0) target = $region61
    $region60: #{tpu_custom_call.1} parent=1 // pred_region
      %90 = dma.done [#allocation10], 16
    $region61: #{tpu_custom_call.1} parent=1 // pred_fallthru
      _
    %p91 = scmp.eq.s32.totalorder 0, 0
    // Predicated region
    $region62: #{tpu_custom_call.1} parent=1 // pred_check
      %p92 = pneg %p91
    $region63: #{tpu_custom_call.1} parent=1 // pred_check_branch
      %94 = sbr.rel (%p92) target = $region65
    $region64: #{tpu_custom_call.1} parent=1 // pred_region
      %v95 = vld [vmem:[#allocation3] sm:$0xff]
      %vm96 = vcmask 523264
      %97 = vst.msk [vmem:[#allocation12] sm:$0xff] %vm96, %v95
    $region65: #{tpu_custom_call.1} parent=1 // pred_fallthru
      _
    %v98 = vld [vmem:[%s0] sm:$0xff]
    %v99 = vld [vmem:[%s0 + $0x8] sm:$0xff]
    %v100 = vld [vmem:[%s0 + $0x10] sm:$0xff]
    %v101 = vld [vmem:[%s0 + $0x18] sm:$0xff]
    %v102 = vld [vmem:[%s0 + $0x20] sm:$0xff]
    %v103 = vld [vmem:[%s0 + $0x28] sm:$0xff]
    %v104 = vld [vmem:[%s0 + $0x30] sm:$0xff]
    %v105 = vld [vmem:[%s0 + $0x38] sm:$0xff]
    %v106 = vld [vmem:[%s2] sm:$0xff]
    %v107 = vld [vmem:[%s3] sm:$0x1]
    %v109 = vlaneseq
    %v110 = vshrl.u32 %v109, 7
    %v111 = vsub.s32 0, %v110
    %v112 = vrot.slane %v107, %v111
    %vm114 = vcmask 64512
    %v116 = vsel %vm114, %v98, 0
    %v119 = vsel %vm114, %v99, 0
    %v122 = vsel %vm114, %v100, 0
    %v125 = vsel %vm114, %v101, 0
    %v128 = vsel %vm114, %v102, 0
    %v131 = vsel %vm114, %v103, 0
    %v134 = vsel %vm114, %v104, 0
    %v137 = vsel %vm114, %v105, 0
    %139 = vmatprep.subr.mxu0 0.0
    %140 = vmatpush1.msra.mxu0 %v106
    %141 = vmatprep.subr.mxu0 0.0
    %142 = vmatpush1.msra.mxu0 0.0
    %143 = vmatprep.subr.mxu0 0.0
    %144 = vmatpush1.msra.mxu0 0.0
    %145 = vmatprep.subr.mxu0 0.0
    %146 = vmatpush1.msra.mxu0 0.0
    %147 = vmatprep.subr.mxu0 0.0
    %148 = vmatpush1.msra.mxu0 0.0
    %149 = vmatprep.subr.mxu0 0.0
    %150 = vmatpush1.msra.mxu0 0.0
    %151 = vmatprep.subr.mxu0 0.0
    %152 = vmatpush1.msra.mxu0 0.0
    %153 = vmatprep.subr.mxu0 0.0
    %154 = vmatpush1.msra.mxu0 0.0
    %155 = vmatprep.subr.mxu0 0.0
    %156 = vmatpush1.msra.mxu0 0.0
    %157 = vmatprep.subr.mxu0 0.0
    %158 = vmatpush1.msra.mxu0 0.0
    %159 = vmatprep.subr.mxu0 0.0
    %160 = vmatpush1.msra.mxu0 0.0
    %161 = vmatprep.subr.mxu0 0.0
    %162 = vmatpush1.msra.mxu0 0.0
    %163 = vmatprep.subr.mxu0 0.0
    %164 = vmatpush1.msra.mxu0 0.0
    %165 = vmatprep.subr.mxu0 0.0
    %166 = vmatpush1.msra.mxu0 0.0
    %167 = vmatprep.subr.mxu0 0.0
    %168 = vmatpush1.msra.mxu0 0.0
    %169 = vmatprep.subr.mxu0 0.0
    %170 = vmatpush1.msra.mxu0 0.0
    %171 = vmatprep.subr.mxu0 0.0
    %172 = vmatpush1.msra.mxu0 0.0
    %173 = vmatprep.subr.mxu0 0.0
    %174 = vmatpush1.msra.mxu0 0.0
    %175 = vmatprep.subr.mxu0 0.0
    %176 = vmatpush1.msra.mxu0 0.0
    %177 = vmatprep.subr.mxu0 0.0
    %178 = vmatpush1.msra.mxu0 0.0
    %179 = vmatprep.subr.mxu0 0.0
    %180 = vmatpush1.msra.mxu0 0.0
    %181 = vmatprep.subr.mxu0 0.0
    %182 = vmatpush1.msra.mxu0 0.0
    %183 = vmatprep.subr.mxu0 0.0
    %184 = vmatpush1.msra.mxu0 0.0
    %185 = vmatprep.subr.mxu0 0.0
    %186 = vmatpush1.msra.mxu0 0.0
    %187 = vmatprep.subr.mxu0 0.0
    %188 = vmatpush1.msra.mxu0 0.0
    %189 = vmatprep.subr.mxu0 0.0
    %190 = vmatpush1.msra.mxu0 0.0
    %191 = vmatprep.subr.mxu0 0.0
    %192 = vmatpush1.msra.mxu0 0.0
    %193 = vmatprep.subr.mxu0 0.0
    %194 = vmatpush1.msra.mxu0 0.0
    %195 = vmatprep.subr.mxu0 0.0
    %196 = vmatpush1.msra.mxu0 0.0
    %197 = vmatprep.subr.mxu0 0.0
    %198 = vmatpush1.msra.mxu0 0.0
    %199 = vmatprep.subr.mxu0 0.0
    %200 = vmatpush1.msra.mxu0 0.0
    %201 = vmatprep.subr.mxu0 0.0
    %202 = vmatpush1.msra.mxu0 0.0
    %203 = vmatprep.mubr.f32.mxu0 0.0
    %204 = vmatmul.mubr.f32.gmra.mrb[0].mxu0 %v116
    %v205 = vpop.f32.mrb[0].mxu0
    %v206 = vadd.f32 %v112, %v205
    %v207 = vpop.f32.mrb[0].mxu0
    %208 = vmatprep.mubr.f32.mxu0 0.0
    %209 = vmatmul.mubr.f32.gmra.mrb[0].mxu0 %v119
    %v210 = vpop.f32.mrb[0].mxu0
    %v211 = vadd.f32 %v112, %v210
    %v212 = vpop.f32.mrb[0].mxu0
    %213 = vmatprep.mubr.f32.mxu0 0.0
    %214 = vmatmul.mubr.f32.gmra.mrb[0].mxu0 %v122
    %v215 = vpop.f32.mrb[0].mxu0
    %v216 = vadd.f32 %v112, %v215
    %v217 = vpop.f32.mrb[0].mxu0
    %218 = vmatprep.mubr.f32.mxu0 0.0
    %219 = vmatmul.mubr.f32.gmra.mrb[0].mxu0 %v125
    %v220 = vpop.f32.mrb[0].mxu0
    %v221 = vadd.f32 %v112, %v220
    %v222 = vpop.f32.mrb[0].mxu0
    %223 = vmatprep.mubr.f32.mxu0 0.0
    %224 = vmatmul.mubr.f32.gmra.mrb[0].mxu0 %v128
    %v225 = vpop.f32.mrb[0].mxu0
    %v226 = vadd.f32 %v112, %v225
    %v227 = vpop.f32.mrb[0].mxu0
    %228 = vmatprep.mubr.f32.mxu0 0.0
    %229 = vmatmul.mubr.f32.gmra.mrb[0].mxu0 %v131
    %v230 = vpop.f32.mrb[0].mxu0
    %v231 = vadd.f32 %v112, %v230
    %v232 = vpop.f32.mrb[0].mxu0
    %233 = vmatprep.mubr.f32.mxu0 0.0
    %234 = vmatmul.mubr.f32.gmra.mrb[0].mxu0 %v134
    %v235 = vpop.f32.mrb[0].mxu0
    %v236 = vadd.f32 %v112, %v235
    %v237 = vpop.f32.mrb[0].mxu0
    %238 = vmatprep.mubr.f32.mxu0 0.0
    %239 = vmatmul.mubr.f32.gmra.mrb[0].mxu0 %v137
    %v240 = vpop.f32.mrb[0].mxu0
    %v241 = vadd.f32 %v112, %v240
    %v242 = vpop.f32.mrb[0].mxu0
    %243 = vdwg.mxu0
    %v244 = vld [vmem:[%s4] sm:$0xff]
    %v245 = vld [vmem:[%s4 + $0x8] sm:$0xff]
    %v246 = vld [vmem:[%s4 + $0x10] sm:$0xff]
    %v247 = vld [vmem:[%s4 + $0x18] sm:$0xff]
    %v248 = vld [vmem:[%s6] sm:$0x1]
    %v250 = vlaneseq
    %v251 = vshrl.u32 %v250, 7
    %v252 = vsub.s32 0, %v251
    %v253 = vrot.slane %v248, %v252
    %vm255 = vcmask 261120
    %v257 = vsel %vm255, %v206, 0
    %v260 = vsel %vm255, %v211, 0
    %v263 = vsel %vm255, %v216, 0
    %v266 = vsel %vm255, %v221, 0
    %v269 = vsel %vm255, %v226, 0
    %v272 = vsel %vm255, %v231, 0
    %v275 = vsel %vm255, %v236, 0
    %v278 = vsel %vm255, %v241, 0
    %280 = vmatprep.subr.mxu0 0.0
    %281 = vmatpush1.msra.mxu0 %v244
    %282 = vmatprep.subr.mxu0 0.0
    %283 = vmatpush1.msra.mxu0 %v245
    %284 = vmatprep.subr.mxu0 0.0
    %285 = vmatpush1.msra.mxu0 %v246
    %286 = vmatprep.subr.mxu0 0.0
    %287 = vmatpush1.msra.mxu0 %v247
    %288 = vmatprep.subr.mxu0 0.0
    %289 = vmatpush1.msra.mxu0 0.0
    %290 = vmatprep.subr.mxu0 0.0
    %291 = vmatpush1.msra.mxu0 0.0
    %292 = vmatprep.subr.mxu0 0.0
    %293 = vmatpush1.msra.mxu0 0.0
    %294 = vmatprep.subr.mxu0 0.0
    %295 = vmatpush1.msra.mxu0 0.0
    %296 = vmatprep.subr.mxu0 0.0
    %297 = vmatpush1.msra.mxu0 0.0
    %298 = vmatprep.subr.mxu0 0.0
    %299 = vmatpush1.msra.mxu0 0.0
    %300 = vmatprep.subr.mxu0 0.0
    %301 = vmatpush1.msra.mxu0 0.0
    %302 = vmatprep.subr.mxu0 0.0
    %303 = vmatpush1.msra.mxu0 0.0
    %304 = vmatprep.subr.mxu0 0.0
    %305 = vmatpush1.msra.mxu0 0.0
    %306 = vmatprep.subr.mxu0 0.0
    %307 = vmatpush1.msra.mxu0 0.0
    %308 = vmatprep.subr.mxu0 0.0
    %309 = vmatpush1.msra.mxu0 0.0
    %310 = vmatprep.subr.mxu0 0.0
    %311 = vmatpush1.msra.mxu0 0.0
    %312 = vmatprep.subr.mxu0 0.0
    %313 = vmatpush1.msra.mxu0 0.0
    %314 = vmatprep.subr.mxu0 0.0
    %315 = vmatpush1.msra.mxu0 0.0
    %316 = vmatprep.subr.mxu0 0.0
    %317 = vmatpush1.msra.mxu0 0.0
    %318 = vmatprep.subr.mxu0 0.0
    %319 = vmatpush1.msra.mxu0 0.0
    %320 = vmatprep.subr.mxu0 0.0
    %321 = vmatpush1.msra.mxu0 0.0
    %322 = vmatprep.subr.mxu0 0.0
    %323 = vmatpush1.msra.mxu0 0.0
    %324 = vmatprep.subr.mxu0 0.0
    %325 = vmatpush1.msra.mxu0 0.0
    %326 = vmatprep.subr.mxu0 0.0
    %327 = vmatpush1.msra.mxu0 0.0
    %328 = vmatprep.subr.mxu0 0.0
    %329 = vmatpush1.msra.mxu0 0.0
    %330 = vmatprep.subr.mxu0 0.0
    %331 = vmatpush1.msra.mxu0 0.0
    %332 = vmatprep.subr.mxu0 0.0
    %333 = vmatpush1.msra.mxu0 0.0
    %334 = vmatprep.subr.mxu0 0.0
    %335 = vmatpush1.msra.mxu0 0.0
    %336 = vmatprep.subr.mxu0 0.0
    %337 = vmatpush1.msra.mxu0 0.0
    %338 = vmatprep.subr.mxu0 0.0
    %339 = vmatpush1.msra.mxu0 0.0
    %340 = vmatprep.subr.mxu0 0.0
    %341 = vmatpush1.msra.mxu0 0.0
    %342 = vmatprep.subr.mxu0 0.0
    %343 = vmatpush1.msra.mxu0 0.0
    %344 = vmatprep.mubr.f32.mxu0 0.0
    %345 = vmatmul.mubr.f32.gmra.mrb[0].mxu0 %v257
    %v346 = vpop.f32.mrb[0].mxu0
    %v347 = vadd.f32 %v253, %v346
    %v348 = vpop.f32.mrb[0].mxu0
    %349 = vmatprep.mubr.f32.mxu0 0.0
    %350 = vmatmul.mubr.f32.gmra.mrb[0].mxu0 %v260
    %v351 = vpop.f32.mrb[0].mxu0
    %v352 = vadd.f32 %v253, %v351
    %v353 = vpop.f32.mrb[0].mxu0
    %354 = vmatprep.mubr.f32.mxu0 0.0
    %355 = vmatmul.mubr.f32.gmra.mrb[0].mxu0 %v263
    %v356 = vpop.f32.mrb[0].mxu0
    %v357 = vadd.f32 %v253, %v356
    %v358 = vpop.f32.mrb[0].mxu0
    %359 = vmatprep.mubr.f32.mxu0 0.0
    %360 = vmatmul.mubr.f32.gmra.mrb[0].mxu0 %v266
    %v361 = vpop.f32.mrb[0].mxu0
    %v362 = vadd.f32 %v253, %v361
    %v363 = vpop.f32.mrb[0].mxu0
    %364 = vmatprep.mubr.f32.mxu0 0.0
    %365 = vmatmul.mubr.f32.gmra.mrb[0].mxu0 %v269
    %v366 = vpop.f32.mrb[0].mxu0
    %v367 = vadd.f32 %v253, %v366
    %v368 = vpop.f32.mrb[0].mxu0
    %369 = vmatprep.mubr.f32.mxu0 0.0
    %370 = vmatmul.mubr.f32.gmra.mrb[0].mxu0 %v272
    %v371 = vpop.f32.mrb[0].mxu0
    %v372 = vadd.f32 %v253, %v371
    %v373 = vpop.f32.mrb[0].mxu0
    %374 = vmatprep.mubr.f32.mxu0 0.0
    %375 = vmatmul.mubr.f32.gmra.mrb[0].mxu0 %v275
    %v376 = vpop.f32.mrb[0].mxu0
    %v377 = vadd.f32 %v253, %v376
    %v378 = vpop.f32.mrb[0].mxu0
    %379 = vmatprep.mubr.f32.mxu0 0.0
    %380 = vmatmul.mubr.f32.gmra.mrb[0].mxu0 %v278
    %v381 = vpop.f32.mrb[0].mxu0
    %v382 = vadd.f32 %v253, %v381
    %v383 = vpop.f32.mrb[0].mxu0
    %384 = vdwg.mxu0
    %v385 = vld [vmem:[#allocation12] sm:$0xff]
    %v386 = vld [vmem:[%s5] sm:$0xff]
    %v387 = vld [vmem:[%s5 + $0x8] sm:$0xff]
    %v388 = vld [vmem:[%s5 + $0x10] sm:$0xff]
    %v389 = vld [vmem:[%s5 + $0x18] sm:$0xff]
    %v391 = vsel %vm255, %v385, 0
    %393 = vmatprep.subr.mxu0 0.0
    %394 = vmatpush1.msra.mxu0 %v386
    %395 = vmatprep.subr.mxu0 0.0
    %396 = vmatpush1.msra.mxu0 %v387
    %397 = vmatprep.subr.mxu0 0.0
    %398 = vmatpush1.msra.mxu0 %v388
    %399 = vmatprep.subr.mxu0 0.0
    %400 = vmatpush1.msra.mxu0 %v389
    %401 = vmatprep.subr.mxu0 0.0
    %402 = vmatpush1.msra.mxu0 0.0
    %403 = vmatprep.subr.mxu0 0.0
    %404 = vmatpush1.msra.mxu0 0.0
    %405 = vmatprep.subr.mxu0 0.0
    %406 = vmatpush1.msra.mxu0 0.0
    %407 = vmatprep.subr.mxu0 0.0
    %408 = vmatpush1.msra.mxu0 0.0
    %409 = vmatprep.subr.mxu0 0.0
    %410 = vmatpush1.msra.mxu0 0.0
    %411 = vmatprep.subr.mxu0 0.0
    %412 = vmatpush1.msra.mxu0 0.0
    %413 = vmatprep.subr.mxu0 0.0
    %414 = vmatpush1.msra.mxu0 0.0
    %415 = vmatprep.subr.mxu0 0.0
    %416 = vmatpush1.msra.mxu0 0.0
    %417 = vmatprep.subr.mxu0 0.0
    %418 = vmatpush1.msra.mxu0 0.0
    %419 = vmatprep.subr.mxu0 0.0
    %420 = vmatpush1.msra.mxu0 0.0
    %421 = vmatprep.subr.mxu0 0.0
    %422 = vmatpush1.msra.mxu0 0.0
    %423 = vmatprep.subr.mxu0 0.0
    %424 = vmatpush1.msra.mxu0 0.0
    %425 = vmatprep.subr.mxu0 0.0
    %426 = vmatpush1.msra.mxu0 0.0
    %427 = vmatprep.subr.mxu0 0.0
    %428 = vmatpush1.msra.mxu0 0.0
    %429 = vmatprep.subr.mxu0 0.0
    %430 = vmatpush1.msra.mxu0 0.0
    %431 = vmatprep.subr.mxu0 0.0
    %432 = vmatpush1.msra.mxu0 0.0
    %433 = vmatprep.subr.mxu0 0.0
    %434 = vmatpush1.msra.mxu0 0.0
    %435 = vmatprep.subr.mxu0 0.0
    %436 = vmatpush1.msra.mxu0 0.0
    %437 = vmatprep.subr.mxu0 0.0
    %438 = vmatpush1.msra.mxu0 0.0
    %439 = vmatprep.subr.mxu0 0.0
    %440 = vmatpush1.msra.mxu0 0.0
    %441 = vmatprep.subr.mxu0 0.0
    %442 = vmatpush1.msra.mxu0 0.0
    %443 = vmatprep.subr.mxu0 0.0
    %444 = vmatpush1.msra.mxu0 0.0
    %445 = vmatprep.subr.mxu0 0.0
    %446 = vmatpush1.msra.mxu0 0.0
    %447 = vmatprep.subr.mxu0 0.0
    %448 = vmatpush1.msra.mxu0 0.0
    %449 = vmatprep.subr.mxu0 0.0
    %450 = vmatpush1.msra.mxu0 0.0
    %451 = vmatprep.subr.mxu0 0.0
    %452 = vmatpush1.msra.mxu0 0.0
    %453 = vmatprep.subr.mxu0 0.0
    %454 = vmatpush1.msra.mxu0 0.0
    %455 = vmatprep.subr.mxu0 0.0
    %456 = vmatpush1.msra.mxu0 0.0
    %457 = vmatprep.mubr.f32.mxu0 0.0
    %458 = vmatmul.mubr.f32.gmra.mrb[0].mxu0 %v391
    %v459 = vpop.f32.mrb[0].mxu0
    %v460 = vadd.f32 0.0, %v459
    %v461 = vpop.f32.mrb[0].mxu0
    %462 = vdwg.mxu0
    %v463 = vadd.f32 %v347, %v460
    %v464 = vxor.u32 %v463, 2147483648
    %v465 = vmul.f32 %v464, 1.442695
    %v466 = vpow.pop %v465
    %v467 = vadd.f32 %v466, 1.0
    %v468 = vrcp.pop %v467
    %v469 = vmul.f32 1.0, %v468
    %v470 = vtanh.pop %v463
    %v471 = vmul.f32 %v469, %v385
    %473 = vrot.lane.b32.xlu0 %v470, 32
    %v474 = vpop.permute.xlu0 %473
    %v476 = vmul.f32 %v469, %v474
    %478 = vrot.lane.b32.xlu0 %v476, 32
    %v479 = vpop.permute.xlu0 %478
    %v481 = vadd.f32 %v471, %v479
    %v482 = vtanh.pop %v481
    %484 = vrot.lane.b32.xlu0 %v482, 32
    %v485 = vpop.permute.xlu0 %484
    %v487 = vmul.f32 %v469, %v485
    %489 = vrot.lane.b32.xlu0 %v487, 64
    %v490 = vpop.permute.xlu0 %489
    %492 = vst.msk [vmem:[#allocation2] sm:$0xff] %vm255, %v490
    %v493 = vld [vmem:[%s5] sm:$0xff]
    %v494 = vld [vmem:[%s5 + $0x8] sm:$0xff]
    %v495 = vld [vmem:[%s5 + $0x10] sm:$0xff]
    %v496 = vld [vmem:[%s5 + $0x18] sm:$0xff]
    %v497 = vsel %vm255, %v490, 0
    %499 = vmatprep.subr.mxu0 0.0
    %500 = vmatpush1.msra.mxu0 %v493
    %501 = vmatprep.subr.mxu0 0.0
    %502 = vmatpush1.msra.mxu0 %v494
    %503 = vmatprep.subr.mxu0 0.0
    %504 = vmatpush1.msra.mxu0 %v495
    %505 = vmatprep.subr.mxu0 0.0
    %506 = vmatpush1.msra.mxu0 %v496
    %507 = vmatprep.subr.mxu0 0.0
    %508 = vmatpush1.msra.mxu0 0.0
    %509 = vmatprep.subr.mxu0 0.0
    %510 = vmatpush1.msra.mxu0 0.0
    %511 = vmatprep.subr.mxu0 0.0
    %512 = vmatpush1.msra.mxu0 0.0
    %513 = vmatprep.subr.mxu0 0.0
    %514 = vmatpush1.msra.mxu0 0.0
    %515 = vmatprep.subr.mxu0 0.0
    %516 = vmatpush1.msra.mxu0 0.0
    %517 = vmatprep.subr.mxu0 0.0
    %518 = vmatpush1.msra.mxu0 0.0
    %519 = vmatprep.subr.mxu0 0.0
    %520 = vmatpush1.msra.mxu0 0.0
    %521 = vmatprep.subr.mxu0 0.0
    %522 = vmatpush1.msra.mxu0 0.0
    %523 = vmatprep.subr.mxu0 0.0
    %524 = vmatpush1.msra.mxu0 0.0
    %525 = vmatprep.subr.mxu0 0.0
    %526 = vmatpush1.msra.mxu0 0.0
    %527 = vmatprep.subr.mxu0 0.0
    %528 = vmatpush1.msra.mxu0 0.0
    %529 = vmatprep.subr.mxu0 0.0
    %530 = vmatpush1.msra.mxu0 0.0
    %531 = vmatprep.subr.mxu0 0.0
    %532 = vmatpush1.msra.mxu0 0.0
    %533 = vmatprep.subr.mxu0 0.0
    %534 = vmatpush1.msra.mxu0 0.0
    %535 = vmatprep.subr.mxu0 0.0
    %536 = vmatpush1.msra.mxu0 0.0
    %537 = vmatprep.subr.mxu0 0.0
    %538 = vmatpush1.msra.mxu0 0.0
    %539 = vmatprep.subr.mxu0 0.0
    %540 = vmatpush1.msra.mxu0 0.0
    %541 = vmatprep.subr.mxu0 0.0
    %542 = vmatpush1.msra.mxu0 0.0
    %543 = vmatprep.subr.mxu0 0.0
    %544 = vmatpush1.msra.mxu0 0.0
    %545 = vmatprep.subr.mxu0 0.0
    %546 = vmatpush1.msra.mxu0 0.0
    %547 = vmatprep.subr.mxu0 0.0
    %548 = vmatpush1.msra.mxu0 0.0
    %549 = vmatprep.subr.mxu0 0.0
    %550 = vmatpush1.msra.mxu0 0.0
    %551 = vmatprep.subr.mxu0 0.0
    %552 = vmatpush1.msra.mxu0 0.0
    %553 = vmatprep.subr.mxu0 0.0
    %554 = vmatpush1.msra.mxu0 0.0
    %555 = vmatprep.subr.mxu0 0.0
    %556 = vmatpush1.msra.mxu0 0.0
    %557 = vmatprep.subr.mxu0 0.0
    %558 = vmatpush1.msra.mxu0 0.0
    %559 = vmatprep.subr.mxu0 0.0
    %560 = vmatpush1.msra.mxu0 0.0
    %561 = vmatprep.subr.mxu0 0.0
    %562 = vmatpush1.msra.mxu0 0.0
    %563 = vmatprep.mubr.f32.mxu0 0.0
    %564 = vmatmul.mubr.f32.gmra.mrb[0].mxu0 %v497
    %v565 = vpop.f32.mrb[0].mxu0
    %v566 = vadd.f32 0.0, %v565
    %v567 = vpop.f32.mrb[0].mxu0
    %568 = vdwg.mxu0
    %v569 = vadd.f32 %v352, %v566
    %v570 = vxor.u32 %v569, 2147483648
    %v571 = vmul.f32 %v570, 1.442695
    %v572 = vpow.pop %v571
    %v573 = vadd.f32 %v572, 1.0
    %v574 = vrcp.pop %v573
    %v575 = vmul.f32 1.0, %v574
    %v576 = vtanh.pop %v569
    %v577 = vmul.f32 %v575, %v481
    %579 = vrot.lane.b32.xlu0 %v576, 32
    %v580 = vpop.permute.xlu0 %579
    %v582 = vmul.f32 %v575, %v580
    %584 = vrot.lane.b32.xlu0 %v582, 32
    %v585 = vpop.permute.xlu0 %584
    %v587 = vadd.f32 %v577, %v585
    %v588 = vtanh.pop %v587
    %590 = vrot.lane.b32.xlu0 %v588, 32
    %v591 = vpop.permute.xlu0 %590
    %v593 = vmul.f32 %v575, %v591
    %595 = vrot.lane.b32.xlu0 %v593, 64
    %v596 = vpop.permute.xlu0 %595
    %598 = vst.msk [vmem:[#allocation2 + $0x8] sm:$0xff] %vm255, %v596
    %v599 = vld [vmem:[%s5] sm:$0xff]
    %v600 = vld [vmem:[%s5 + $0x8] sm:$0xff]
    %v601 = vld [vmem:[%s5 + $0x10] sm:$0xff]
    %v602 = vld [vmem:[%s5 + $0x18] sm:$0xff]
    %v603 = vsel %vm255, %v596, 0
    %605 = vmatprep.subr.mxu0 0.0
    %606 = vmatpush1.msra.mxu0 %v599
    %607 = vmatprep.subr.mxu0 0.0
    %608 = vmatpush1.msra.mxu0 %v600
    %609 = vmatprep.subr.mxu0 0.0
    %610 = vmatpush1.msra.mxu0 %v601
    %611 = vmatprep.subr.mxu0 0.0
    %612 = vmatpush1.msra.mxu0 %v602
    %613 = vmatprep.subr.mxu0 0.0
    %614 = vmatpush1.msra.mxu0 0.0
    %615 = vmatprep.subr.mxu0 0.0
    %616 = vmatpush1.msra.mxu0 0.0
    %617 = vmatprep.subr.mxu0 0.0
    %618 = vmatpush1.msra.mxu0 0.0
    %619 = vmatprep.subr.mxu0 0.0
    %620 = vmatpush1.msra.mxu0 0.0
    %621 = vmatprep.subr.mxu0 0.0
    %622 = vmatpush1.msra.mxu0 0.0
    %623 = vmatprep.subr.mxu0 0.0
    %624 = vmatpush1.msra.mxu0 0.0
    %625 = vmatprep.subr.mxu0 0.0
    %626 = vmatpush1.msra.mxu0 0.0
    %627 = vmatprep.subr.mxu0 0.0
    %628 = vmatpush1.msra.mxu0 0.0
    %629 = vmatprep.subr.mxu0 0.0
    %630 = vmatpush1.msra.mxu0 0.0
    %631 = vmatprep.subr.mxu0 0.0
    %632 = vmatpush1.msra.mxu0 0.0
    %633 = vmatprep.subr.mxu0 0.0
    %634 = vmatpush1.msra.mxu0 0.0
    %635 = vmatprep.subr.mxu0 0.0
    %636 = vmatpush1.msra.mxu0 0.0
    %637 = vmatprep.subr.mxu0 0.0
    %638 = vmatpush1.msra.mxu0 0.0
    %639 = vmatprep.subr.mxu0 0.0
    %640 = vmatpush1.msra.mxu0 0.0
    %641 = vmatprep.subr.mxu0 0.0
    %642 = vmatpush1.msra.mxu0 0.0
    %643 = vmatprep.subr.mxu0 0.0
    %644 = vmatpush1.msra.mxu0 0.0
    %645 = vmatprep.subr.mxu0 0.0
    %646 = vmatpush1.msra.mxu0 0.0
    %647 = vmatprep.subr.mxu0 0.0
    %648 = vmatpush1.msra.mxu0 0.0
    %649 = vmatprep.subr.mxu0 0.0
    %650 = vmatpush1.msra.mxu0 0.0
    %651 = vmatprep.subr.mxu0 0.0
    %652 = vmatpush1.msra.mxu0 0.0
    %653 = vmatprep.subr.mxu0 0.0
    %654 = vmatpush1.msra.mxu0 0.0
    %655 = vmatprep.subr.mxu0 0.0
    %656 = vmatpush1.msra.mxu0 0.0
    %657 = vmatprep.subr.mxu0 0.0
    %658 = vmatpush1.msra.mxu0 0.0
    %659 = vmatprep.subr.mxu0 0.0
    %660 = vmatpush1.msra.mxu0 0.0
    %661 = vmatprep.subr.mxu0 0.0
    %662 = vmatpush1.msra.mxu0 0.0
    %663 = vmatprep.subr.mxu0 0.0
    %664 = vmatpush1.msra.mxu0 0.0
    %665 = vmatprep.subr.mxu0 0.0
    %666 = vmatpush1.msra.mxu0 0.0
    %667 = vmatprep.subr.mxu0 0.0
    %668 = vmatpush1.msra.mxu0 0.0
    %669 = vmatprep.mubr.f32.mxu0 0.0
    %670 = vmatmul.mubr.f32.gmra.mrb[0].mxu0 %v603
    %v671 = vpop.f32.mrb[0].mxu0
    %v672 = vadd.f32 0.0, %v671
    %v673 = vpop.f32.mrb[0].mxu0
    %674 = vdwg.mxu0
    %v675 = vadd.f32 %v357, %v672
    %v676 = vxor.u32 %v675, 2147483648
    %v677 = vmul.f32 %v676, 1.442695
    %v678 = vpow.pop %v677
    %v679 = vadd.f32 %v678, 1.0
    %v680 = vrcp.pop %v679
    %v681 = vmul.f32 1.0, %v680
    %v682 = vtanh.pop %v675
    %v683 = vmul.f32 %v681, %v587
    %685 = vrot.lane.b32.xlu0 %v682, 32
    %v686 = vpop.permute.xlu0 %685
    %v688 = vmul.f32 %v681, %v686
    %690 = vrot.lane.b32.xlu0 %v688, 32
    %v691 = vpop.permute.xlu0 %690
    %v693 = vadd.f32 %v683, %v691
    %v694 = vtanh.pop %v693
    %696 = vrot.lane.b32.xlu0 %v694, 32
    %v697 = vpop.permute.xlu0 %696
    %v699 = vmul.f32 %v681, %v697
    %701 = vrot.lane.b32.xlu0 %v699, 64
    %v702 = vpop.permute.xlu0 %701
    %704 = vst.msk [vmem:[#allocation2 + $0x10] sm:$0xff] %vm255, %v702
    %v705 = vld [vmem:[%s5] sm:$0xff]
    %v706 = vld [vmem:[%s5 + $0x8] sm:$0xff]
    %v707 = vld [vmem:[%s5 + $0x10] sm:$0xff]
    %v708 = vld [vmem:[%s5 + $0x18] sm:$0xff]
    %v709 = vsel %vm255, %v702, 0
    %711 = vmatprep.subr.mxu0 0.0
    %712 = vmatpush1.msra.mxu0 %v705
    %713 = vmatprep.subr.mxu0 0.0
    %714 = vmatpush1.msra.mxu0 %v706
    %715 = vmatprep.subr.mxu0 0.0
    %716 = vmatpush1.msra.mxu0 %v707
    %717 = vmatprep.subr.mxu0 0.0
    %718 = vmatpush1.msra.mxu0 %v708
    %719 = vmatprep.subr.mxu0 0.0
    %720 = vmatpush1.msra.mxu0 0.0
    %721 = vmatprep.subr.mxu0 0.0
    %722 = vmatpush1.msra.mxu0 0.0
    %723 = vmatprep.subr.mxu0 0.0
    %724 = vmatpush1.msra.mxu0 0.0
    %725 = vmatprep.subr.mxu0 0.0
    %726 = vmatpush1.msra.mxu0 0.0
    %727 = vmatprep.subr.mxu0 0.0
    %728 = vmatpush1.msra.mxu0 0.0
    %729 = vmatprep.subr.mxu0 0.0
    %730 = vmatpush1.msra.mxu0 0.0
    %731 = vmatprep.subr.mxu0 0.0
    %732 = vmatpush1.msra.mxu0 0.0
    %733 = vmatprep.subr.mxu0 0.0
    %734 = vmatpush1.msra.mxu0 0.0
    %735 = vmatprep.subr.mxu0 0.0
    %736 = vmatpush1.msra.mxu0 0.0
    %737 = vmatprep.subr.mxu0 0.0
    %738 = vmatpush1.msra.mxu0 0.0
    %739 = vmatprep.subr.mxu0 0.0
    %740 = vmatpush1.msra.mxu0 0.0
    %741 = vmatprep.subr.mxu0 0.0
    %742 = vmatpush1.msra.mxu0 0.0
    %743 = vmatprep.subr.mxu0 0.0
    %744 = vmatpush1.msra.mxu0 0.0
    %745 = vmatprep.subr.mxu0 0.0
    %746 = vmatpush1.msra.mxu0 0.0
    %747 = vmatprep.subr.mxu0 0.0
    %748 = vmatpush1.msra.mxu0 0.0
    %749 = vmatprep.subr.mxu0 0.0
    %750 = vmatpush1.msra.mxu0 0.0
    %751 = vmatprep.subr.mxu0 0.0
    %752 = vmatpush1.msra.mxu0 0.0
    %753 = vmatprep.subr.mxu0 0.0
    %754 = vmatpush1.msra.mxu0 0.0
    %755 = vmatprep.subr.mxu0 0.0
    %756 = vmatpush1.msra.mxu0 0.0
    %757 = vmatprep.subr.mxu0 0.0
    %758 = vmatpush1.msra.mxu0 0.0
    %759 = vmatprep.subr.mxu0 0.0
    %760 = vmatpush1.msra.mxu0 0.0
    %761 = vmatprep.subr.mxu0 0.0
    %762 = vmatpush1.msra.mxu0 0.0
    %763 = vmatprep.subr.mxu0 0.0
    %764 = vmatpush1.msra.mxu0 0.0
    %765 = vmatprep.subr.mxu0 0.0
    %766 = vmatpush1.msra.mxu0 0.0
    %767 = vmatprep.subr.mxu0 0.0
    %768 = vmatpush1.msra.mxu0 0.0
    %769 = vmatprep.subr.mxu0 0.0
    %770 = vmatpush1.msra.mxu0 0.0
    %771 = vmatprep.subr.mxu0 0.0
    %772 = vmatpush1.msra.mxu0 0.0
    %773 = vmatprep.subr.mxu0 0.0
    %774 = vmatpush1.msra.mxu0 0.0
    %775 = vmatprep.mubr.f32.mxu0 0.0
    %776 = vmatmul.mubr.f32.gmra.mrb[0].mxu0 %v709
    %v777 = vpop.f32.mrb[0].mxu0
    %v778 = vadd.f32 0.0, %v777
    %v779 = vpop.f32.mrb[0].mxu0
    %780 = vdwg.mxu0
    %v781 = vadd.f32 %v362, %v778
    %v782 = vxor.u32 %v781, 2147483648
    %v783 = vmul.f32 %v782, 1.442695
    %v784 = vpow.pop %v783
    %v785 = vadd.f32 %v784, 1.0
    %v786 = vrcp.pop %v785
    %v787 = vmul.f32 1.0, %v786
    %v788 = vtanh.pop %v781
    %v789 = vmul.f32 %v787, %v693
    %791 = vrot.lane.b32.xlu0 %v788, 32
    %v792 = vpop.permute.xlu0 %791
    %v794 = vmul.f32 %v787, %v792
    %796 = vrot.lane.b32.xlu0 %v794, 32
    %v797 = vpop.permute.xlu0 %796
    %v799 = vadd.f32 %v789, %v797
    %v800 = vtanh.pop %v799
    %802 = vrot.lane.b32.xlu0 %v800, 32
    %v803 = vpop.permute.xlu0 %802
    %v805 = vmul.f32 %v787, %v803
    %807 = vrot.lane.b32.xlu0 %v805, 64
    %v808 = vpop.permute.xlu0 %807
    %810 = vst.msk [vmem:[#allocation2 + $0x18] sm:$0xff] %vm255, %v808
    %v811 = vld [vmem:[%s5] sm:$0xff]
    %v812 = vld [vmem:[%s5 + $0x8] sm:$0xff]
    %v813 = vld [vmem:[%s5 + $0x10] sm:$0xff]
    %v814 = vld [vmem:[%s5 + $0x18] sm:$0xff]
    %v815 = vsel %vm255, %v808, 0
    %817 = vmatprep.subr.mxu0 0.0
    %818 = vmatpush1.msra.mxu0 %v811
    %819 = vmatprep.subr.mxu0 0.0
    %820 = vmatpush1.msra.mxu0 %v812
    %821 = vmatprep.subr.mxu0 0.0
    %822 = vmatpush1.msra.mxu0 %v813
    %823 = vmatprep.subr.mxu0 0.0
    %824 = vmatpush1.msra.mxu0 %v814
    %825 = vmatprep.subr.mxu0 0.0
    %826 = vmatpush1.msra.mxu0 0.0
    %827 = vmatprep.subr.mxu0 0.0
    %828 = vmatpush1.msra.mxu0 0.0
    %829 = vmatprep.subr.mxu0 0.0
    %830 = vmatpush1.msra.mxu0 0.0
    %831 = vmatprep.subr.mxu0 0.0
    %832 = vmatpush1.msra.mxu0 0.0
    %833 = vmatprep.subr.mxu0 0.0
    %834 = vmatpush1.msra.mxu0 0.0
    %835 = vmatprep.subr.mxu0 0.0
    %836 = vmatpush1.msra.mxu0 0.0
    %837 = vmatprep.subr.mxu0 0.0
    %838 = vmatpush1.msra.mxu0 0.0
    %839 = vmatprep.subr.mxu0 0.0
    %840 = vmatpush1.msra.mxu0 0.0
    %841 = vmatprep.subr.mxu0 0.0
    %842 = vmatpush1.msra.mxu0 0.0
    %843 = vmatprep.subr.mxu0 0.0
    %844 = vmatpush1.msra.mxu0 0.0
    %845 = vmatprep.subr.mxu0 0.0
    %846 = vmatpush1.msra.mxu0 0.0
    %847 = vmatprep.subr.mxu0 0.0
    %848 = vmatpush1.msra.mxu0 0.0
    %849 = vmatprep.subr.mxu0 0.0
    %850 = vmatpush1.msra.mxu0 0.0
    %851 = vmatprep.subr.mxu0 0.0
    %852 = vmatpush1.msra.mxu0 0.0
    %853 = vmatprep.subr.mxu0 0.0
    %854 = vmatpush1.msra.mxu0 0.0
    %855 = vmatprep.subr.mxu0 0.0
    %856 = vmatpush1.msra.mxu0 0.0
    %857 = vmatprep.subr.mxu0 0.0
    %858 = vmatpush1.msra.mxu0 0.0
    %859 = vmatprep.subr.mxu0 0.0
    %860 = vmatpush1.msra.mxu0 0.0
    %861 = vmatprep.subr.mxu0 0.0
    %862 = vmatpush1.msra.mxu0 0.0
    %863 = vmatprep.subr.mxu0 0.0
    %864 = vmatpush1.msra.mxu0 0.0
    %865 = vmatprep.subr.mxu0 0.0
    %866 = vmatpush1.msra.mxu0 0.0
    %867 = vmatprep.subr.mxu0 0.0
    %868 = vmatpush1.msra.mxu0 0.0
    %869 = vmatprep.subr.mxu0 0.0
    %870 = vmatpush1.msra.mxu0 0.0
    %871 = vmatprep.subr.mxu0 0.0
    %872 = vmatpush1.msra.mxu0 0.0
    %873 = vmatprep.subr.mxu0 0.0
    %874 = vmatpush1.msra.mxu0 0.0
    %875 = vmatprep.subr.mxu0 0.0
    %876 = vmatpush1.msra.mxu0 0.0
    %877 = vmatprep.subr.mxu0 0.0
    %878 = vmatpush1.msra.mxu0 0.0
    %879 = vmatprep.subr.mxu0 0.0
    %880 = vmatpush1.msra.mxu0 0.0
    %881 = vmatprep.mubr.f32.mxu0 0.0
    %882 = vmatmul.mubr.f32.gmra.mrb[0].mxu0 %v815
    %v883 = vpop.f32.mrb[0].mxu0
    %v884 = vadd.f32 0.0, %v883
    %v885 = vpop.f32.mrb[0].mxu0
    %886 = vdwg.mxu0
    %v887 = vadd.f32 %v367, %v884
    %v888 = vxor.u32 %v887, 2147483648
    %v889 = vmul.f32 %v888, 1.442695
    %v890 = vpow.pop %v889
    %v891 = vadd.f32 %v890, 1.0
    %v892 = vrcp.pop %v891
    %v893 = vmul.f32 1.0, %v892
    %v894 = vtanh.pop %v887
    %v895 = vmul.f32 %v893, %v799
    %897 = vrot.lane.b32.xlu0 %v894, 32
    %v898 = vpop.permute.xlu0 %897
    %v900 = vmul.f32 %v893, %v898
    %902 = vrot.lane.b32.xlu0 %v900, 32
    %v903 = vpop.permute.xlu0 %902
    %v905 = vadd.f32 %v895, %v903
    %v906 = vtanh.pop %v905
    %908 = vrot.lane.b32.xlu0 %v906, 32
    %v909 = vpop.permute.xlu0 %908
    %v911 = vmul.f32 %v893, %v909
    %913 = vrot.lane.b32.xlu0 %v911, 64
    %v914 = vpop.permute.xlu0 %913
    %916 = vst.msk [vmem:[#allocation2 + $0x20] sm:$0xff] %vm255, %v914
    %v917 = vld [vmem:[%s5] sm:$0xff]
    %v918 = vld [vmem:[%s5 + $0x8] sm:$0xff]
    %v919 = vld [vmem:[%s5 + $0x10] sm:$0xff]
    %v920 = vld [vmem:[%s5 + $0x18] sm:$0xff]
    %v921 = vsel %vm255, %v914, 0
    %923 = vmatprep.subr.mxu0 0.0
    %924 = vmatpush1.msra.mxu0 %v917
    %925 = vmatprep.subr.mxu0 0.0
    %926 = vmatpush1.msra.mxu0 %v918
    %927 = vmatprep.subr.mxu0 0.0
    %928 = vmatpush1.msra.mxu0 %v919
    %929 = vmatprep.subr.mxu0 0.0
    %930 = vmatpush1.msra.mxu0 %v920
    %931 = vmatprep.subr.mxu0 0.0
    %932 = vmatpush1.msra.mxu0 0.0
    %933 = vmatprep.subr.mxu0 0.0
    %934 = vmatpush1.msra.mxu0 0.0
    %935 = vmatprep.subr.mxu0 0.0
    %936 = vmatpush1.msra.mxu0 0.0
    %937 = vmatprep.subr.mxu0 0.0
    %938 = vmatpush1.msra.mxu0 0.0
    %939 = vmatprep.subr.mxu0 0.0
    %940 = vmatpush1.msra.mxu0 0.0
    %941 = vmatprep.subr.mxu0 0.0
    %942 = vmatpush1.msra.mxu0 0.0
    %943 = vmatprep.subr.mxu0 0.0
    %944 = vmatpush1.msra.mxu0 0.0
    %945 = vmatprep.subr.mxu0 0.0
    %946 = vmatpush1.msra.mxu0 0.0
    %947 = vmatprep.subr.mxu0 0.0
    %948 = vmatpush1.msra.mxu0 0.0
    %949 = vmatprep.subr.mxu0 0.0
    %950 = vmatpush1.msra.mxu0 0.0
    %951 = vmatprep.subr.mxu0 0.0
    %952 = vmatpush1.msra.mxu0 0.0
    %953 = vmatprep.subr.mxu0 0.0
    %954 = vmatpush1.msra.mxu0 0.0
    %955 = vmatprep.subr.mxu0 0.0
    %956 = vmatpush1.msra.mxu0 0.0
    %957 = vmatprep.subr.mxu0 0.0
    %958 = vmatpush1.msra.mxu0 0.0
    %959 = vmatprep.subr.mxu0 0.0
    %960 = vmatpush1.msra.mxu0 0.0
    %961 = vmatprep.subr.mxu0 0.0
    %962 = vmatpush1.msra.mxu0 0.0
    %963 = vmatprep.subr.mxu0 0.0
    %964 = vmatpush1.msra.mxu0 0.0
    %965 = vmatprep.subr.mxu0 0.0
    %966 = vmatpush1.msra.mxu0 0.0
    %967 = vmatprep.subr.mxu0 0.0
    %968 = vmatpush1.msra.mxu0 0.0
    %969 = vmatprep.subr.mxu0 0.0
    %970 = vmatpush1.msra.mxu0 0.0
    %971 = vmatprep.subr.mxu0 0.0
    %972 = vmatpush1.msra.mxu0 0.0
    %973 = vmatprep.subr.mxu0 0.0
    %974 = vmatpush1.msra.mxu0 0.0
    %975 = vmatprep.subr.mxu0 0.0
    %976 = vmatpush1.msra.mxu0 0.0
    %977 = vmatprep.subr.mxu0 0.0
    %978 = vmatpush1.msra.mxu0 0.0
    %979 = vmatprep.subr.mxu0 0.0
    %980 = vmatpush1.msra.mxu0 0.0
    %981 = vmatprep.subr.mxu0 0.0
    %982 = vmatpush1.msra.mxu0 0.0
    %983 = vmatprep.subr.mxu0 0.0
    %984 = vmatpush1.msra.mxu0 0.0
    %985 = vmatprep.subr.mxu0 0.0
    %986 = vmatpush1.msra.mxu0 0.0
    %987 = vmatprep.mubr.f32.mxu0 0.0
    %988 = vmatmul.mubr.f32.gmra.mrb[0].mxu0 %v921
    %v989 = vpop.f32.mrb[0].mxu0
    %v990 = vadd.f32 0.0, %v989
    %v991 = vpop.f32.mrb[0].mxu0
    %992 = vdwg.mxu0
    %v993 = vadd.f32 %v372, %v990
    %v994 = vxor.u32 %v993, 2147483648
    %v995 = vmul.f32 %v994, 1.442695
    %v996 = vpow.pop %v995
    %v997 = vadd.f32 %v996, 1.0
    %v998 = vrcp.pop %v997
    %v999 = vmul.f32 1.0, %v998
    %v1000 = vtanh.pop %v993
    %v1001 = vmul.f32 %v999, %v905
    %1003 = vrot.lane.b32.xlu0 %v1000, 32
    %v1004 = vpop.permute.xlu0 %1003
    %v1006 = vmul.f32 %v999, %v1004
    %1008 = vrot.lane.b32.xlu0 %v1006, 32
    %v1009 = vpop.permute.xlu0 %1008
    %v1011 = vadd.f32 %v1001, %v1009
    %v1012 = vtanh.pop %v1011
    %1014 = vrot.lane.b32.xlu0 %v1012, 32
    %v1015 = vpop.permute.xlu0 %1014
    %v1017 = vmul.f32 %v999, %v1015
    %1019 = vrot.lane.b32.xlu0 %v1017, 64
    %v1020 = vpop.permute.xlu0 %1019
    %1022 = vst.msk [vmem:[#allocation2 + $0x28] sm:$0xff] %vm255, %v1020
    %v1023 = vld [vmem:[%s5] sm:$0xff]
    %v1024 = vld [vmem:[%s5 + $0x8] sm:$0xff]
    %v1025 = vld [vmem:[%s5 + $0x10] sm:$0xff]
    %v1026 = vld [vmem:[%s5 + $0x18] sm:$0xff]
    %v1027 = vsel %vm255, %v1020, 0
    %1029 = vmatprep.subr.mxu0 0.0
    %1030 = vmatpush1.msra.mxu0 %v1023
    %1031 = vmatprep.subr.mxu0 0.0
    %1032 = vmatpush1.msra.mxu0 %v1024
    %1033 = vmatprep.subr.mxu0 0.0
    %1034 = vmatpush1.msra.mxu0 %v1025
    %1035 = vmatprep.subr.mxu0 0.0
    %1036 = vmatpush1.msra.mxu0 %v1026
    %1037 = vmatprep.subr.mxu0 0.0
    %1038 = vmatpush1.msra.mxu0 0.0
    %1039 = vmatprep.subr.mxu0 0.0
    %1040 = vmatpush1.msra.mxu0 0.0
    %1041 = vmatprep.subr.mxu0 0.0
    %1042 = vmatpush1.msra.mxu0 0.0
    %1043 = vmatprep.subr.mxu0 0.0
    %1044 = vmatpush1.msra.mxu0 0.0
    %1045 = vmatprep.subr.mxu0 0.0
    %1046 = vmatpush1.msra.mxu0 0.0
    %1047 = vmatprep.subr.mxu0 0.0
    %1048 = vmatpush1.msra.mxu0 0.0
    %1049 = vmatprep.subr.mxu0 0.0
    %1050 = vmatpush1.msra.mxu0 0.0
    %1051 = vmatprep.subr.mxu0 0.0
    %1052 = vmatpush1.msra.mxu0 0.0
    %1053 = vmatprep.subr.mxu0 0.0
    %1054 = vmatpush1.msra.mxu0 0.0
    %1055 = vmatprep.subr.mxu0 0.0
    %1056 = vmatpush1.msra.mxu0 0.0
    %1057 = vmatprep.subr.mxu0 0.0
    %1058 = vmatpush1.msra.mxu0 0.0
    %1059 = vmatprep.subr.mxu0 0.0
    %1060 = vmatpush1.msra.mxu0 0.0
    %1061 = vmatprep.subr.mxu0 0.0
    %1062 = vmatpush1.msra.mxu0 0.0
    %1063 = vmatprep.subr.mxu0 0.0
    %1064 = vmatpush1.msra.mxu0 0.0
    %1065 = vmatprep.subr.mxu0 0.0
    %1066 = vmatpush1.msra.mxu0 0.0
    %1067 = vmatprep.subr.mxu0 0.0
    %1068 = vmatpush1.msra.mxu0 0.0
    %1069 = vmatprep.subr.mxu0 0.0
    %1070 = vmatpush1.msra.mxu0 0.0
    %1071 = vmatprep.subr.mxu0 0.0
    %1072 = vmatpush1.msra.mxu0 0.0
    %1073 = vmatprep.subr.mxu0 0.0
    %1074 = vmatpush1.msra.mxu0 0.0
    %1075 = vmatprep.subr.mxu0 0.0
    %1076 = vmatpush1.msra.mxu0 0.0
    %1077 = vmatprep.subr.mxu0 0.0
    %1078 = vmatpush1.msra.mxu0 0.0
    %1079 = vmatprep.subr.mxu0 0.0
    %1080 = vmatpush1.msra.mxu0 0.0
    %1081 = vmatprep.subr.mxu0 0.0
    %1082 = vmatpush1.msra.mxu0 0.0
    %1083 = vmatprep.subr.mxu0 0.0
    %1084 = vmatpush1.msra.mxu0 0.0
    %1085 = vmatprep.subr.mxu0 0.0
    %1086 = vmatpush1.msra.mxu0 0.0
    %1087 = vmatprep.subr.mxu0 0.0
    %1088 = vmatpush1.msra.mxu0 0.0
    %1089 = vmatprep.subr.mxu0 0.0
    %1090 = vmatpush1.msra.mxu0 0.0
    %1091 = vmatprep.subr.mxu0 0.0
    %1092 = vmatpush1.msra.mxu0 0.0
    %1093 = vmatprep.mubr.f32.mxu0 0.0
    %1094 = vmatmul.mubr.f32.gmra.mrb[0].mxu0 %v1027
    %v1095 = vpop.f32.mrb[0].mxu0
    %v1096 = vadd.f32 0.0, %v1095
    %v1097 = vpop.f32.mrb[0].mxu0
    %1098 = vdwg.mxu0
    %v1099 = vadd.f32 %v377, %v1096
    %v1100 = vxor.u32 %v1099, 2147483648
    %v1101 = vmul.f32 %v1100, 1.442695
    %v1102 = vpow.pop %v1101
    %v1103 = vadd.f32 %v1102, 1.0
    %v1104 = vrcp.pop %v1103
    %v1105 = vmul.f32 1.0, %v1104
    %v1106 = vtanh.pop %v1099
    %v1107 = vmul.f32 %v1105, %v1011
    %1109 = vrot.lane.b32.xlu0 %v1106, 32
    %v1110 = vpop.permute.xlu0 %1109
    %v1112 = vmul.f32 %v1105, %v1110
    %1114 = vrot.lane.b32.xlu0 %v1112, 32
    %v1115 = vpop.permute.xlu0 %1114
    %v1117 = vadd.f32 %v1107, %v1115
    %v1118 = vtanh.pop %v1117
    %1120 = vrot.lane.b32.xlu0 %v1118, 32
    %v1121 = vpop.permute.xlu0 %1120
    %v1123 = vmul.f32 %v1105, %v1121
    %1125 = vrot.lane.b32.xlu0 %v1123, 64
    %v1126 = vpop.permute.xlu0 %1125
    %1128 = vst.msk [vmem:[#allocation2 + $0x30] sm:$0xff] %vm255, %v1126
    %v1129 = vld [vmem:[%s5] sm:$0xff]
    %v1130 = vld [vmem:[%s5 + $0x8] sm:$0xff]
    %v1131 = vld [vmem:[%s5 + $0x10] sm:$0xff]
    %v1132 = vld [vmem:[%s5 + $0x18] sm:$0xff]
    %v1133 = vsel %vm255, %v1126, 0
    %1135 = vmatprep.subr.mxu0 0.0
    %1136 = vmatpush1.msra.mxu0 %v1129
    %1137 = vmatprep.subr.mxu0 0.0
    %1138 = vmatpush1.msra.mxu0 %v1130
    %1139 = vmatprep.subr.mxu0 0.0
    %1140 = vmatpush1.msra.mxu0 %v1131
    %1141 = vmatprep.subr.mxu0 0.0
    %1142 = vmatpush1.msra.mxu0 %v1132
    %1143 = vmatprep.subr.mxu0 0.0
    %1144 = vmatpush1.msra.mxu0 0.0
    %1145 = vmatprep.subr.mxu0 0.0
    %1146 = vmatpush1.msra.mxu0 0.0
    %1147 = vmatprep.subr.mxu0 0.0
    %1148 = vmatpush1.msra.mxu0 0.0
    %1149 = vmatprep.subr.mxu0 0.0
    %1150 = vmatpush1.msra.mxu0 0.0
    %1151 = vmatprep.subr.mxu0 0.0
    %1152 = vmatpush1.msra.mxu0 0.0
    %1153 = vmatprep.subr.mxu0 0.0
    %1154 = vmatpush1.msra.mxu0 0.0
    %1155 = vmatprep.subr.mxu0 0.0
    %1156 = vmatpush1.msra.mxu0 0.0
    %1157 = vmatprep.subr.mxu0 0.0
    %1158 = vmatpush1.msra.mxu0 0.0
    %1159 = vmatprep.subr.mxu0 0.0
    %1160 = vmatpush1.msra.mxu0 0.0
    %1161 = vmatprep.subr.mxu0 0.0
    %1162 = vmatpush1.msra.mxu0 0.0
    %1163 = vmatprep.subr.mxu0 0.0
    %1164 = vmatpush1.msra.mxu0 0.0
    %1165 = vmatprep.subr.mxu0 0.0
    %1166 = vmatpush1.msra.mxu0 0.0
    %1167 = vmatprep.subr.mxu0 0.0
    %1168 = vmatpush1.msra.mxu0 0.0
    %1169 = vmatprep.subr.mxu0 0.0
    %1170 = vmatpush1.msra.mxu0 0.0
    %1171 = vmatprep.subr.mxu0 0.0
    %1172 = vmatpush1.msra.mxu0 0.0
    %1173 = vmatprep.subr.mxu0 0.0
    %1174 = vmatpush1.msra.mxu0 0.0
    %1175 = vmatprep.subr.mxu0 0.0
    %1176 = vmatpush1.msra.mxu0 0.0
    %1177 = vmatprep.subr.mxu0 0.0
    %1178 = vmatpush1.msra.mxu0 0.0
    %1179 = vmatprep.subr.mxu0 0.0
    %1180 = vmatpush1.msra.mxu0 0.0
    %1181 = vmatprep.subr.mxu0 0.0
    %1182 = vmatpush1.msra.mxu0 0.0
    %1183 = vmatprep.subr.mxu0 0.0
    %1184 = vmatpush1.msra.mxu0 0.0
    %1185 = vmatprep.subr.mxu0 0.0
    %1186 = vmatpush1.msra.mxu0 0.0
    %1187 = vmatprep.subr.mxu0 0.0
    %1188 = vmatpush1.msra.mxu0 0.0
    %1189 = vmatprep.subr.mxu0 0.0
    %1190 = vmatpush1.msra.mxu0 0.0
    %1191 = vmatprep.subr.mxu0 0.0
    %1192 = vmatpush1.msra.mxu0 0.0
    %1193 = vmatprep.subr.mxu0 0.0
    %1194 = vmatpush1.msra.mxu0 0.0
    %1195 = vmatprep.subr.mxu0 0.0
    %1196 = vmatpush1.msra.mxu0 0.0
    %1197 = vmatprep.subr.mxu0 0.0
    %1198 = vmatpush1.msra.mxu0 0.0
    %1199 = vmatprep.mubr.f32.mxu0 0.0
    %1200 = vmatmul.mubr.f32.gmra.mrb[0].mxu0 %v1133
    %v1201 = vpop.f32.mrb[0].mxu0
    %v1202 = vadd.f32 0.0, %v1201
    %v1203 = vpop.f32.mrb[0].mxu0
    %1204 = vdwg.mxu0
    %v1205 = vadd.f32 %v382, %v1202
    %v1206 = vxor.u32 %v1205, 2147483648
    %v1207 = vmul.f32 %v1206, 1.442695
    %v1208 = vpow.pop %v1207
    %v1209 = vadd.f32 %v1208, 1.0
    %v1210 = vrcp.pop %v1209
    %v1211 = vmul.f32 1.0, %v1210
    %v1212 = vtanh.pop %v1205
    %v1213 = vmul.f32 %v1211, %v1117
    %1215 = vrot.lane.b32.xlu0 %v1212, 32
    %v1216 = vpop.permute.xlu0 %1215
    %v1218 = vmul.f32 %v1211, %v1216
    %1220 = vrot.lane.b32.xlu0 %v1218, 32
    %v1221 = vpop.permute.xlu0 %1220
    %v1223 = vadd.f32 %v1213, %v1221
    %v1224 = vtanh.pop %v1223
    %1226 = vrot.lane.b32.xlu0 %v1224, 32
    %v1227 = vpop.permute.xlu0 %1226
    %v1229 = vmul.f32 %v1211, %v1227
    %1231 = vrot.lane.b32.xlu0 %v1229, 64
    %v1232 = vpop.permute.xlu0 %1231
    %1234 = vst.msk [vmem:[#allocation2 + $0x38] sm:$0xff] %vm255, %v1232
    %1235 = vst.msk [vmem:[#allocation12] sm:$0xff] %vm255, %v1232
    %vm1236 = vcmask 523520
    %1237 = vst.msk [vmem:[#allocation12] sm:$0xff] %vm1236, %v1223
    %v1238 = vld [vmem:[#allocation2] sm:$0xff]
    %v1239 = vld [vmem:[#allocation2 + $0x8] sm:$0xff]
    %v1240 = vld [vmem:[#allocation2 + $0x10] sm:$0xff]
    %v1241 = vld [vmem:[#allocation2 + $0x18] sm:$0xff]
    %v1242 = vld [vmem:[#allocation2 + $0x20] sm:$0xff]
    %v1243 = vld [vmem:[#allocation2 + $0x28] sm:$0xff]
    %v1244 = vld [vmem:[#allocation2 + $0x30] sm:$0xff]
    %v1245 = vld [vmem:[#allocation2 + $0x38] sm:$0xff]
    %v1246 = vld [vmem:[%s7] sm:$0xff]
    %v1247 = vld [vmem:[%s7 + $0x8] sm:$0xff]
    %v1248 = vld [vmem:[%s7 + $0x10] sm:$0xff]
    %v1249 = vld [vmem:[%s7 + $0x18] sm:$0xff]
    %v1250 = vld [vmem:[#allocation6] sm:$0x1]
    %v1252 = vlaneseq
    %v1253 = vshrl.u32 %v1252, 7
    %v1254 = vsub.s32 0, %v1253
    %v1255 = vrot.slane %v1250, %v1254
    %v1258 = vsel %vm255, %v1238, 0
    %v1261 = vsel %vm255, %v1239, 0
    %v1264 = vsel %vm255, %v1240, 0
    %v1267 = vsel %vm255, %v1241, 0
    %v1270 = vsel %vm255, %v1242, 0
    %v1273 = vsel %vm255, %v1243, 0
    %v1276 = vsel %vm255, %v1244, 0
    %v1279 = vsel %vm255, %v1245, 0
    %1281 = vmatprep.subr.mxu0 0.0
    %1282 = vmatpush1.msra.mxu0 %v1246
    %1283 = vmatprep.subr.mxu0 0.0
    %1284 = vmatpush1.msra.mxu0 %v1247
    %1285 = vmatprep.subr.mxu0 0.0
    %1286 = vmatpush1.msra.mxu0 %v1248
    %1287 = vmatprep.subr.mxu0 0.0
    %1288 = vmatpush1.msra.mxu0 %v1249
    %1289 = vmatprep.subr.mxu0 0.0
    %1290 = vmatpush1.msra.mxu0 0.0
    %1291 = vmatprep.subr.mxu0 0.0
    %1292 = vmatpush1.msra.mxu0 0.0
    %1293 = vmatprep.subr.mxu0 0.0
    %1294 = vmatpush1.msra.mxu0 0.0
    %1295 = vmatprep.subr.mxu0 0.0
    %1296 = vmatpush1.msra.mxu0 0.0
    %1297 = vmatprep.subr.mxu0 0.0
    %1298 = vmatpush1.msra.mxu0 0.0
    %1299 = vmatprep.subr.mxu0 0.0
    %1300 = vmatpush1.msra.mxu0 0.0
    %1301 = vmatprep.subr.mxu0 0.0
    %1302 = vmatpush1.msra.mxu0 0.0
    %1303 = vmatprep.subr.mxu0 0.0
    %1304 = vmatpush1.msra.mxu0 0.0
    %1305 = vmatprep.subr.mxu0 0.0
    %1306 = vmatpush1.msra.mxu0 0.0
    %1307 = vmatprep.subr.mxu0 0.0
    %1308 = vmatpush1.msra.mxu0 0.0
    %1309 = vmatprep.subr.mxu0 0.0
    %1310 = vmatpush1.msra.mxu0 0.0
    %1311 = vmatprep.subr.mxu0 0.0
    %1312 = vmatpush1.msra.mxu0 0.0
    %1313 = vmatprep.subr.mxu0 0.0
    %1314 = vmatpush1.msra.mxu0 0.0
    %1315 = vmatprep.subr.mxu0 0.0
    %1316 = vmatpush1.msra.mxu0 0.0
    %1317 = vmatprep.subr.mxu0 0.0
    %1318 = vmatpush1.msra.mxu0 0.0
    %1319 = vmatprep.subr.mxu0 0.0
    %1320 = vmatpush1.msra.mxu0 0.0
    %1321 = vmatprep.subr.mxu0 0.0
    %1322 = vmatpush1.msra.mxu0 0.0
    %1323 = vmatprep.subr.mxu0 0.0
    %1324 = vmatpush1.msra.mxu0 0.0
    %1325 = vmatprep.subr.mxu0 0.0
    %1326 = vmatpush1.msra.mxu0 0.0
    %1327 = vmatprep.subr.mxu0 0.0
    %1328 = vmatpush1.msra.mxu0 0.0
    %1329 = vmatprep.subr.mxu0 0.0
    %1330 = vmatpush1.msra.mxu0 0.0
    %1331 = vmatprep.subr.mxu0 0.0
    %1332 = vmatpush1.msra.mxu0 0.0
    %1333 = vmatprep.subr.mxu0 0.0
    %1334 = vmatpush1.msra.mxu0 0.0
    %1335 = vmatprep.subr.mxu0 0.0
    %1336 = vmatpush1.msra.mxu0 0.0
    %1337 = vmatprep.subr.mxu0 0.0
    %1338 = vmatpush1.msra.mxu0 0.0
    %1339 = vmatprep.subr.mxu0 0.0
    %1340 = vmatpush1.msra.mxu0 0.0
    %1341 = vmatprep.subr.mxu0 0.0
    %1342 = vmatpush1.msra.mxu0 0.0
    %1343 = vmatprep.subr.mxu0 0.0
    %1344 = vmatpush1.msra.mxu0 0.0
    %1345 = vmatprep.mubr.f32.mxu0 0.0
    %1346 = vmatmul.mubr.f32.gmra.mrb[0].mxu0 %v1258
    %v1347 = vpop.f32.mrb[0].mxu0
    %v1348 = vadd.f32 %v1255, %v1347
    %v1349 = vpop.f32.mrb[0].mxu0
    %1350 = vmatprep.mubr.f32.mxu0 0.0
    %1351 = vmatmul.mubr.f32.gmra.mrb[0].mxu0 %v1261
    %v1352 = vpop.f32.mrb[0].mxu0
    %v1353 = vadd.f32 %v1255, %v1352
    %v1354 = vpop.f32.mrb[0].mxu0
    %1355 = vmatprep.mubr.f32.mxu0 0.0
    %1356 = vmatmul.mubr.f32.gmra.mrb[0].mxu0 %v1264
    %v1357 = vpop.f32.mrb[0].mxu0
    %v1358 = vadd.f32 %v1255, %v1357
    %v1359 = vpop.f32.mrb[0].mxu0
    %1360 = vmatprep.mubr.f32.mxu0 0.0
    %1361 = vmatmul.mubr.f32.gmra.mrb[0].mxu0 %v1267
    %v1362 = vpop.f32.mrb[0].mxu0
    %v1363 = vadd.f32 %v1255, %v1362
    %v1364 = vpop.f32.mrb[0].mxu0
    %1365 = vmatprep.mubr.f32.mxu0 0.0
    %1366 = vmatmul.mubr.f32.gmra.mrb[0].mxu0 %v1270
    %v1367 = vpop.f32.mrb[0].mxu0
    %v1368 = vadd.f32 %v1255, %v1367
    %v1369 = vpop.f32.mrb[0].mxu0
    %1370 = vmatprep.mubr.f32.mxu0 0.0
    %1371 = vmatmul.mubr.f32.gmra.mrb[0].mxu0 %v1273
    %v1372 = vpop.f32.mrb[0].mxu0
    %v1373 = vadd.f32 %v1255, %v1372
    %v1374 = vpop.f32.mrb[0].mxu0
    %1375 = vmatprep.mubr.f32.mxu0 0.0
    %1376 = vmatmul.mubr.f32.gmra.mrb[0].mxu0 %v1276
    %v1377 = vpop.f32.mrb[0].mxu0
    %v1378 = vadd.f32 %v1255, %v1377
    %v1379 = vpop.f32.mrb[0].mxu0
    %1380 = vmatprep.mubr.f32.mxu0 0.0
    %1381 = vmatmul.mubr.f32.gmra.mrb[0].mxu0 %v1279
    %v1382 = vpop.f32.mrb[0].mxu0
    %v1383 = vadd.f32 %v1255, %v1382
    %v1384 = vpop.f32.mrb[0].mxu0
    %1385 = vdwg.mxu0
    %v1386 = vmax.f32 %v1348, 0.0
    %v1387 = vmax.f32 %v1353, 0.0
    %v1388 = vmax.f32 %v1358, 0.0
    %v1389 = vmax.f32 %v1363, 0.0
    %v1390 = vmax.f32 %v1368, 0.0
    %v1391 = vmax.f32 %v1373, 0.0
    %v1392 = vmax.f32 %v1378, 0.0
    %v1393 = vmax.f32 %v1383, 0.0
    %v1394 = vld [vmem:[#allocation8] sm:$0xff]
    %v1395 = vld [vmem:[#allocation8 + $0x8] sm:$0xff]
    %v1396 = vld [vmem:[#allocation8 + $0x10] sm:$0xff]
    %v1397 = vld [vmem:[#allocation8 + $0x18] sm:$0xff]
    %v1398 = vld [vmem:[#allocation8 + $0x20] sm:$0xff]
    %v1399 = vld [vmem:[#allocation8 + $0x28] sm:$0xff]
    %v1400 = vld [vmem:[#allocation8 + $0x30] sm:$0xff]
    %v1401 = vld [vmem:[#allocation8 + $0x38] sm:$0xff]
    %v1402 = vld [vmem:[#allocation8 + $0x40] sm:$0xff]
    %v1403 = vld [vmem:[#allocation8 + $0x48] sm:$0xff]
    %v1404 = vld [vmem:[#allocation8 + $0x50] sm:$0xff]
    %v1405 = vld [vmem:[#allocation8 + $0x58] sm:$0xff]
    %v1406 = vld [vmem:[#allocation8 + $0x60] sm:$0xff]
    %v1407 = vld [vmem:[#allocation8 + $0x68] sm:$0xff]
    %v1408 = vld [vmem:[#allocation8 + $0x70] sm:$0xff]
    %v1409 = vld [vmem:[#allocation8 + $0x78] sm:$0xff]
    %v1410 = vld [vmem:[#allocation9] sm:$0x1]
    %v1412 = vlaneseq
    %v1413 = vshrl.u32 %v1412, 7
    %v1414 = vsub.s32 0, %v1413
    %v1415 = vrot.slane %v1410, %v1414
    %1417 = vmatprep.subr.mxu0 0.0
    %1418 = vmatpush1.msra.mxu0 %v1394
    %1419 = vmatprep.subr.mxu0 0.0
    %1420 = vmatpush1.msra.mxu0 %v1395
    %1421 = vmatprep.subr.mxu0 0.0
    %1422 = vmatpush1.msra.mxu0 %v1396
    %1423 = vmatprep.subr.mxu0 0.0
    %1424 = vmatpush1.msra.mxu0 %v1397
    %1425 = vmatprep.subr.mxu0 0.0
    %1426 = vmatpush1.msra.mxu0 %v1398
    %1427 = vmatprep.subr.mxu0 0.0
    %1428 = vmatpush1.msra.mxu0 %v1399
    %1429 = vmatprep.subr.mxu0 0.0
    %1430 = vmatpush1.msra.mxu0 %v1400
    %1431 = vmatprep.subr.mxu0 0.0
    %1432 = vmatpush1.msra.mxu0 %v1401
    %1433 = vmatprep.subr.mxu0 0.0
    %1434 = vmatpush1.msra.mxu0 %v1402
    %1435 = vmatprep.subr.mxu0 0.0
    %1436 = vmatpush1.msra.mxu0 %v1403
    %1437 = vmatprep.subr.mxu0 0.0
    %1438 = vmatpush1.msra.mxu0 %v1404
    %1439 = vmatprep.subr.mxu0 0.0
    %1440 = vmatpush1.msra.mxu0 %v1405
    %1441 = vmatprep.subr.mxu0 0.0
    %1442 = vmatpush1.msra.mxu0 %v1406
    %1443 = vmatprep.subr.mxu0 0.0
    %1444 = vmatpush1.msra.mxu0 %v1407
    %1445 = vmatprep.subr.mxu0 0.0
    %1446 = vmatpush1.msra.mxu0 %v1408
    %1447 = vmatprep.subr.mxu0 0.0
    %1448 = vmatpush1.msra.mxu0 %v1409
    %1449 = vmatprep.subr.mxu0 0.0
    %1450 = vmatpush1.msra.mxu0 0.0
    %1451 = vmatprep.subr.mxu0 0.0
    %1452 = vmatpush1.msra.mxu0 0.0
    %1453 = vmatprep.subr.mxu0 0.0
    %1454 = vmatpush1.msra.mxu0 0.0
    %1455 = vmatprep.subr.mxu0 0.0
    %1456 = vmatpush1.msra.mxu0 0.0
    %1457 = vmatprep.subr.mxu0 0.0
    %1458 = vmatpush1.msra.mxu0 0.0
    %1459 = vmatprep.subr.mxu0 0.0
    %1460 = vmatpush1.msra.mxu0 0.0
    %1461 = vmatprep.subr.mxu0 0.0
    %1462 = vmatpush1.msra.mxu0 0.0
    %1463 = vmatprep.subr.mxu0 0.0
    %1464 = vmatpush1.msra.mxu0 0.0
    %1465 = vmatprep.subr.mxu0 0.0
    %1466 = vmatpush1.msra.mxu0 0.0
    %1467 = vmatprep.subr.mxu0 0.0
    %1468 = vmatpush1.msra.mxu0 0.0
    %1469 = vmatprep.subr.mxu0 0.0
    %1470 = vmatpush1.msra.mxu0 0.0
    %1471 = vmatprep.subr.mxu0 0.0
    %1472 = vmatpush1.msra.mxu0 0.0
    %1473 = vmatprep.subr.mxu0 0.0
    %1474 = vmatpush1.msra.mxu0 0.0
    %1475 = vmatprep.subr.mxu0 0.0
    %1476 = vmatpush1.msra.mxu0 0.0
    %1477 = vmatprep.subr.mxu0 0.0
    %1478 = vmatpush1.msra.mxu0 0.0
    %1479 = vmatprep.subr.mxu0 0.0
    %1480 = vmatpush1.msra.mxu0 0.0
    %1481 = vmatprep.mubr.f32.mxu0 0.0
    %1482 = vmatmul.mubr.f32.gmra.mrb[0].mxu0 %v1386
    %v1483 = vpop.f32.mrb[0].mxu0
    %v1484 = vadd.f32 %v1415, %v1483
    %v1485 = vpop.f32.mrb[0].mxu0
    %1486 = vmatprep.mubr.f32.mxu0 0.0
    %1487 = vmatmul.mubr.f32.gmra.mrb[0].mxu0 %v1387
    %v1488 = vpop.f32.mrb[0].mxu0
    %v1489 = vadd.f32 %v1415, %v1488
    %v1490 = vpop.f32.mrb[0].mxu0
    %1491 = vmatprep.mubr.f32.mxu0 0.0
    %1492 = vmatmul.mubr.f32.gmra.mrb[0].mxu0 %v1388
    %v1493 = vpop.f32.mrb[0].mxu0
    %v1494 = vadd.f32 %v1415, %v1493
    %v1495 = vpop.f32.mrb[0].mxu0
    %1496 = vmatprep.mubr.f32.mxu0 0.0
    %1497 = vmatmul.mubr.f32.gmra.mrb[0].mxu0 %v1389
    %v1498 = vpop.f32.mrb[0].mxu0
    %v1499 = vadd.f32 %v1415, %v1498
    %v1500 = vpop.f32.mrb[0].mxu0
    %1501 = vmatprep.mubr.f32.mxu0 0.0
    %1502 = vmatmul.mubr.f32.gmra.mrb[0].mxu0 %v1390
    %v1503 = vpop.f32.mrb[0].mxu0
    %v1504 = vadd.f32 %v1415, %v1503
    %v1505 = vpop.f32.mrb[0].mxu0
    %1506 = vmatprep.mubr.f32.mxu0 0.0
    %1507 = vmatmul.mubr.f32.gmra.mrb[0].mxu0 %v1391
    %v1508 = vpop.f32.mrb[0].mxu0
    %v1509 = vadd.f32 %v1415, %v1508
    %v1510 = vpop.f32.mrb[0].mxu0
    %1511 = vmatprep.mubr.f32.mxu0 0.0
    %1512 = vmatmul.mubr.f32.gmra.mrb[0].mxu0 %v1392
    %v1513 = vpop.f32.mrb[0].mxu0
    %v1514 = vadd.f32 %v1415, %v1513
    %v1515 = vpop.f32.mrb[0].mxu0
    %1516 = vmatprep.mubr.f32.mxu0 0.0
    %1517 = vmatmul.mubr.f32.gmra.mrb[0].mxu0 %v1393
    %v1518 = vpop.f32.mrb[0].mxu0
    %v1519 = vadd.f32 %v1415, %v1518
    %v1520 = vpop.f32.mrb[0].mxu0
    %1521 = vdwg.mxu0
    %1522 = vst [vmem:[#allocation11] sm:$0xff] %v1484
    %1523 = vst [vmem:[#allocation11 + $0x8] sm:$0xff] %v1489
    %1524 = vst [vmem:[#allocation11 + $0x10] sm:$0xff] %v1494
    %1525 = vst [vmem:[#allocation11 + $0x18] sm:$0xff] %v1499
    %1526 = vst [vmem:[#allocation11 + $0x20] sm:$0xff] %v1504
    %1527 = vst [vmem:[#allocation11 + $0x28] sm:$0xff] %v1509
    %1528 = vst [vmem:[#allocation11 + $0x30] sm:$0xff] %v1514
    %1529 = vst [vmem:[#allocation11 + $0x38] sm:$0xff] %v1519
    // Predicated region
    $region66: #{tpu_custom_call.1} parent=1 // pred_check
      _
    $region67: #{tpu_custom_call.1} parent=1 // pred_check_branch
      %1531 = sbr.rel (0) target = $region69
    $region68: #{tpu_custom_call.1} parent=1 // pred_region
      %s1533 = ssub.s32 1024, 1024
      %1534 = vsyncadd [#allocation5], %s1533
      %s1535 = sshll.u32 [#allocation11], 4
      %s1536 = int_to_ptr.vmem [resolvable:$true] %s1535
      %1541 = dma.vmem_to_hbm [thread:$0]  %s1536, 1024, %s11, [#allocation5], 128, 128, 8
    $region69: #{tpu_custom_call.1} parent=1 // pred_fallthru
      _
    // Predicated region
    $region70: #{tpu_custom_call.1} parent=1 // pred_check
      _
    $region71: #{tpu_custom_call.1} parent=1 // pred_check_branch
      %1543 = sbr.rel (0) target = $region73
    $region72: #{tpu_custom_call.1} parent=1 // pred_region
      %s1545 = ssub.s32 128, 128
      %1546 = vsyncadd [#allocation13], %s1545
      %s1548 = sshll.u32 [#allocation12], 4
      %s1549 = int_to_ptr.vmem [resolvable:$true] %s1548
      %1551 = dma.vmem_to_hbm [thread:$0]  %s1549, 128, %s12, [#allocation13]
    $region73: #{tpu_custom_call.1} parent=1 // pred_fallthru
      _
    // Predicated region
    $region74: #{tpu_custom_call.1} parent=1 // pred_check
      _
    $region75: #{tpu_custom_call.1} parent=1 // pred_check_branch
      %1553 = sbr.rel (0) target = $region77
    $region76: #{tpu_custom_call.1} parent=1 // pred_region
      %1554 = dma.done [#allocation5], 1024
    $region77: #{tpu_custom_call.1} parent=1 // pred_fallthru
      _
    // Predicated region
    $region78: #{tpu_custom_call.1} parent=1 // pred_check
      _
    $region79: #{tpu_custom_call.1} parent=1 // pred_check_branch
      %1556 = sbr.rel (0) target = $region81
    $region80: #{tpu_custom_call.1} parent=1 // pred_region
      %1557 = dma.done [#allocation13], 128
    $region81: #{tpu_custom_call.1} parent=1 // pred_fallthru
      _
    %1558 = vsyncpa [#allocation4], 1
    %1559 = vsyncpa [#allocation7], 1
    %1560 = vsyncpa [#allocation10], 1
    %1561 = vsyncpa [#allocation5], 1
    %1562 = vsyncpa [#allocation13], 1

</llo_original>
